<compile_context>
chip_gen: v5e
topology: v5e:2x2
jax: 0.10.0
libtpu: 0.0.40
codegen_flags: <defaults>
</compile_context>

<pallas_src>
from functools import partial

import jax
import jax.numpy as jnp
from jax.experimental import pallas as pl
from jax.experimental.pallas import tpu as pltpu


def _vmem_limit_bytes():
    """Generation-aware scoped-VMEM limit: 75% of physical, <= 100 MiB."""
    cap = 128 * 1024 * 1024
    try:
        info = pltpu.get_tpu_info()
        cap = int(getattr(info, "vmem_capacity_bytes", cap))
    except Exception:
        pass
    return int(min(cap * 3 // 4, 100 * 1024 * 1024))


def _make_kernel(H, W):
    HW = H * W

    def kernel(x_ref,            # (1, Cp, HW)   input (channel-major, padded)
               m_ref,            # (9, HW)       per-tap 0/1 edge masks
               s1_ref, b1_ref,   # (Cp, 1) f32   folded BN1 scale / bias
               w1_ref,           # (9, C0p, Cp)  conv1 weights, tap-major, BN2
                                 #               scale already folded in
               b2_ref,           # (C0p, 1) f32  folded BN2 bias
               w2_ref,           # (9, C1, C0p)  conv2 weights, tap-major
               wp_ref,           # (C1, Cp)      1x1 projection weights
               o_ref,            # (1, C1, HW)   output (channel-major)
               bn1_ref,          # VMEM (Cp, HW)  compute-dtype bn1 activations
               bn2_ref):         # VMEM (C0p, HW) compute-dtype bn2 activations

        def conv3x3_accumulate(w_tap_ref, act, acc):
            """acc += sum_t w_tap_ref[t] @ (roll(act, tap_t) * mask_t).

            `act` is a (C, HW) compute-dtype value; padding=1 halo handled by
            the precomputed 0/1 edge masks.  9 small matmuls, f32 accumulation
            (on v7x the MRB accumulates in place, so the split is nearly free).
            """
            for kh in range(3):
                for kw in range(3):
                    t = kh * 3 + kw
                    off = (kh - 1) * W + (kw - 1)
                    if off == 0:
                        piece = act
                    else:
                        piece = (pltpu.roll(act, shift=(-off) % HW, axis=1)
                                 * m_ref[t:t + 1, :])
                    contrib = jnp.dot(w_tap_ref[t], piece,
                                      preferred_element_type=jnp.float32)
                    acc = contrib if acc is None else acc + contrib
            return acc

        # ---- bn1 = relu(BN1(x))  (folded affine, eval semantics, f32 math) ----
        x = x_ref[0]                                              # (Cp, HW) f32
        bn1_ref[...] = jnp.maximum(x * s1_ref[...] + b1_ref[...],
                                   0.0).astype(bn1_ref.dtype)
        bn1 = bn1_ref[...]                                        # compute dtype

        # ---- conv1 (3x3, pad=1), BN2 scale pre-folded into w1 ----
        h1 = conv3x3_accumulate(w1_ref, bn1, None)                # (C0p, HW) f32

        # ---- bn2 = relu(h1 + b2) ----
        bn2_ref[...] = jnp.maximum(h1 + b2_ref[...],
                                   0.0).astype(bn2_ref.dtype)
        bn2 = bn2_ref[...]                                        # compute dtype

        # ---- conv2 (3x3, pad=1) fused with the 1x1 projection shortcut:
        #      projection matmul seeds the conv2 accumulator ----
        acc = jnp.dot(wp_ref[...], bn1_ref[...],
                      preferred_element_type=jnp.float32)         # (C1, HW) f32
        acc = conv3x3_accumulate(w2_ref, bn2, acc)
        o_ref[0] = acc.astype(o_ref.dtype)

    return kernel


def identity_residual_block(x_nchw, params, *, eps=1e-5,
                            compute_dtype=jnp.float32):
    """Fused Pallas TPU IdentityResidualBlock.  x_nchw: (N, Cin, H, W) f32."""
    N, Cin, H, W = x_nchw.shape
    HW = H * W
    C0 = params["w1"].shape[0]       # conv1: (C0, Cin, 3, 3) OIHW
    C1 = params["w2"].shape[0]       # conv2: (C1, C0, 3, 3)  OIHW
    f32 = jnp.float32
    cdt = jnp.dtype(compute_dtype)
    pack = 32 // cdt.itemsize        # sublane packing unit: 8 (f32) / 16 (bf16)
    Cp = ((Cin + pack - 1) // pack) * pack
    C0p = ((C0 + pack - 1) // pack) * pack

    # Fold BN (eval mode): y = x*scale + bias.  Padded channels get scale=bias=0
    # -> relu(0)=0 and zero weights, so they contribute nothing.
    s1 = params["g1"] / jnp.sqrt(params["v1"] + eps)
    b1 = params["b1"] - params["m1"] * s1
    s2 = params["g2"] / jnp.sqrt(params["v2"] + eps)
    b2 = params["b2"] - params["m2"] * s2
    s1 = jnp.pad(s1.astype(f32), (0, Cp - Cin)).reshape(Cp, 1)
    b1 = jnp.pad(b1.astype(f32), (0, Cp - Cin)).reshape(Cp, 1)
    b2p = jnp.pad(b2.astype(f32), (0, C0p - C0)).reshape(C0p, 1)

    # Channel-major, spatial-flattened activations (== NCHW reshaped; no
    # transposes, the HW axis is lane-dense in both input and output blocks).
    x = jnp.pad(x_nchw.astype(f32).reshape(N, Cin, HW),
                ((0, 0), (0, Cp - Cin), (0, 0)))                  # (N, Cp, HW)

    # conv1 weights OIHW -> tap-major (9, C0p, Cp), with BN2 scale folded in.
    w1 = params["w1"].astype(f32) * s2[:, None, None, None]       # (C0,Cin,3,3)
    w1 = jnp.transpose(w1, (2, 3, 0, 1)).reshape(9, C0, Cin)
    w1 = jnp.pad(w1, ((0, 0), (0, C0p - C0), (0, Cp - Cin))).astype(cdt)

    # conv2 weights OIHW -> tap-major (9, C1, C0p).
    w2 = jnp.transpose(params["w2"].astype(f32), (2, 3, 0, 1)).reshape(9, C1, C0)
    w2 = jnp.pad(w2, ((0, 0), (0, 0), (0, C0p - C0))).astype(cdt)

    # 1x1 projection weights -> (C1, Cp).
    wp = jnp.pad(params["wp"][:, :, 0, 0].astype(f32),
                 ((0, 0), (0, Cp - Cin))).astype(cdt)

    # Per-tap 0/1 edge masks for the padding=1 halo (geometry constants),
    # stored in compute dtype so tap math stays homogeneous (bf16 on v6e/v7x).
    hh, ww = jnp.meshgrid(jnp.arange(H), jnp.arange(W), indexing="ij")
    masks = []
    for kh in range(3):
        for kw in range(3):
            dh, dw = kh - 1, kw - 1
            v = ((hh + dh >= 0) & (hh + dh < H) &
                 (ww + dw >= 0) & (ww + dw < W))
            masks.append(v.reshape(HW))
    tap_mask = jnp.stack(masks, axis=0).astype(cdt)               # (9, HW)

    out = pl.pallas_call(
        _make_kernel(H, W),
        out_shape=jax.ShapeDtypeStruct((N, C1, HW), f32),
        grid_spec=pltpu.PrefetchScalarGridSpec(
            num_scalar_prefetch=0,
            grid=(N,),
            in_specs=[
                pl.BlockSpec((1, Cp, HW), lambda n: (n, 0, 0)),     # x
                pl.BlockSpec((9, HW), lambda n: (0, 0)),            # tap masks
                pl.BlockSpec((Cp, 1), lambda n: (0, 0)),            # s1
                pl.BlockSpec((Cp, 1), lambda n: (0, 0)),            # b1
                pl.BlockSpec((9, C0p, Cp), lambda n: (0, 0, 0)),    # w1 (s2 folded)
                pl.BlockSpec((C0p, 1), lambda n: (0, 0)),           # b2
                pl.BlockSpec((9, C1, C0p), lambda n: (0, 0, 0)),    # w2
                pl.BlockSpec((C1, Cp), lambda n: (0, 0)),           # wp (projection)
            ],
            out_specs=pl.BlockSpec((1, C1, HW), lambda n: (n, 0, 0)),
            scratch_shapes=[
                pltpu.VMEM((Cp, HW), cdt),      # bn1 activations
                pltpu.VMEM((C0p, HW), cdt),     # bn2 activations
            ],
        ),
        compiler_params=pltpu.CompilerParams(
            dimension_semantics=("parallel",),
            vmem_limit_bytes=_vmem_limit_bytes()),
    )(x, tap_mask, s1, b1, w1, b2p, w2, wp)

    # (N, C1, H*W) -> (N, C1, H, W): already NCHW, reshape only.
    return out.reshape(N, C1, H, W)


# -------------------- pure-JAX reference (for verification) --------------------
def _reference(x, p, eps=1e-5):
    def bnrelu(h, g, b, m, v):
        return jax.nn.relu((h - m[None, :, None, None]) /
                           jnp.sqrt(v[None, :, None, None] + eps)
                           * g[None, :, None, None] + b[None, :, None, None])

    dn = ("NCHW", "OIHW", "NCHW")
    conv = partial(jax.lax.conv_general_dilated,
                   window_strides=(1, 1), dimension_numbers=dn)
    bn1 = bnrelu(x, p["g1"], p["b1"], p["m1"], p["v1"])
    shortcut = conv(bn1, p["wp"], padding="VALID")
    h = conv(bn1, p["w1"], padding=((1, 1), (1, 1)))
    h = bnrelu(h, p["g2"], p["b2"], p["m2"], p["v2"])
    h = conv(h, p["w2"], padding=((1, 1), (1, 1)))
    return h + shortcut


if __name__ == "__main__":
    # Small shapes: batch=2, in_channels=4, channels=[8, 8], spatial 16x16
    N, Cin, H, W = 2, 4, 16, 16
    C0, C1 = 8, 8

    key = jax.random.PRNGKey(0)
    ks = jax.random.split(key, 12)
    x = jax.random.normal(ks[0], (N, Cin, H, W), jnp.float32)

    params = {
        # bn1 over in_channels
        "g1": jax.random.normal(ks[1], (Cin,), jnp.float32) * 0.1 + 1.0,
        "b1": jax.random.normal(ks[2], (Cin,), jnp.float32) * 0.1,
        "m1": jax.random.normal(ks[3], (Cin,), jnp.float32) * 0.1,
        "v1": jax.random.uniform(ks[4], (Cin,), jnp.float32, 0.5, 1.5),
        # conv1 (C0, Cin, 3, 3)
        "w1": jax.random.normal(ks[5], (C0, Cin, 3, 3), jnp.float32) * 0.2,
        # bn2 over channels[0]
        "g2": jax.random.normal(ks[6], (C0,), jnp.float32) * 0.1 + 1.0,
        "b2": jax.random.normal(ks[7], (C0,), jnp.float32) * 0.1,
        "m2": jax.random.normal(ks[8], (C0,), jnp.float32) * 0.1,
        "v2": jax.random.uniform(ks[9], (C0,), jnp.float32, 0.5, 1.5),
        # conv2 (C1, C0, 3, 3)
        "w2": jax.random.normal(ks[10], (C1, C0, 3, 3), jnp.float32) * 0.2,
        # proj_conv (C1, Cin, 1, 1)  (present since Cin != C1)
        "wp": jax.random.normal(ks[11], (C1, Cin, 1, 1), jnp.float32) * 0.2,
    }

    ref = _reference(x, params)

    # f32 matmul operands: must match the reference tightly.
    out = jax.block_until_ready(identity_residual_block(x, params))
    assert out.shape == (N, C1, H, W), out.shape
    assert jnp.allclose(out, ref, atol=1e-4, rtol=1e-4), (
        float(jnp.max(jnp.abs(out - ref))))

    # bf16 matmul operands (f32 accumulation, f32 BN math): looser tolerance —
    # note the projection-shortcut input is also bf16-quantized in this mode.
    out_bf16 = jax.block_until_ready(
        identity_residual_block(x, params, compute_dtype=jnp.bfloat16))
    assert jnp.allclose(out_bf16, ref, atol=3e-1, rtol=5e-2), (
        float(jnp.max(jnp.abs(out_bf16 - ref))))

    print("KERNEL_OK")
</pallas_src>

<mosaic_0001>
module attributes {stable_mosaic.version = 11 : i64} {
  func.func @kernel(%arg0: i32, %arg1: memref<1x8x256xf32, #tpu.memory_space<vmem>>, %arg2: memref<9x256xf32, #tpu.memory_space<vmem>>, %arg3: memref<8x1xf32, #tpu.memory_space<vmem>>, %arg4: memref<8x1xf32, #tpu.memory_space<vmem>>, %arg5: memref<9x8x8xf32, #tpu.memory_space<vmem>>, %arg6: memref<8x1xf32, #tpu.memory_space<vmem>>, %arg7: memref<9x8x8xf32, #tpu.memory_space<vmem>>, %arg8: memref<8x8xf32, #tpu.memory_space<vmem>>, %arg9: memref<1x8x256xf32, #tpu.memory_space<vmem>>, %arg10: memref<8x256xf32, #tpu.memory_space<vmem>>, %arg11: memref<8x256xf32, #tpu.memory_space<vmem>>) attributes {dimension_semantics = [#tpu.dimension_semantics<parallel>], iteration_bounds = array<i64: 2>, scalar_prefetch = 0 : i64, scratch_operands = 2 : i64, tpu.core_type = #tpu.core_type<tc>, window_params = [{transform_indices = @transform_0, window_bounds = array<i64: 1, 8, 256>}, {pipeline_mode = #tpu.pipeline_mode<synchronous>, transform_indices = @transform_1, window_bounds = array<i64: 9, 256>}, {pipeline_mode = #tpu.pipeline_mode<synchronous>, transform_indices = @transform_2, window_bounds = array<i64: 8, 1>}, {pipeline_mode = #tpu.pipeline_mode<synchronous>, transform_indices = @transform_3, window_bounds = array<i64: 8, 1>}, {pipeline_mode = #tpu.pipeline_mode<synchronous>, transform_indices = @transform_4, window_bounds = array<i64: 9, 8, 8>}, {pipeline_mode = #tpu.pipeline_mode<synchronous>, transform_indices = @transform_5, window_bounds = array<i64: 8, 1>}, {pipeline_mode = #tpu.pipeline_mode<synchronous>, transform_indices = @transform_6, window_bounds = array<i64: 9, 8, 8>}, {pipeline_mode = #tpu.pipeline_mode<synchronous>, transform_indices = @transform_7, window_bounds = array<i64: 8, 8>}, {transform_indices = @transform_8, window_bounds = array<i64: 1, 8, 256>}]} {
    %c0 = arith.constant 0 : index
    %c0_0 = arith.constant 0 : index
    %c0_1 = arith.constant 0 : index
    %0 = vector.load %arg1[%c0, %c0_0, %c0_1] : memref<1x8x256xf32, #tpu.memory_space<vmem>>, vector<1x8x256xf32>
    %1 = vector.shape_cast %0 : vector<1x8x256xf32> to vector<8x256xf32>
    %c0_2 = arith.constant 0 : index
    %c0_3 = arith.constant 0 : index
    %2 = vector.load %arg3[%c0_2, %c0_3] : memref<8x1xf32, #tpu.memory_space<vmem>>, vector<8x1xf32>
    %3 = vector.broadcast %2 : vector<8x1xf32> to vector<8x256xf32>
    %4 = arith.mulf %1, %3 : vector<8x256xf32>
    %c0_4 = arith.constant 0 : index
    %c0_5 = arith.constant 0 : index
    %5 = vector.load %arg4[%c0_4, %c0_5] : memref<8x1xf32, #tpu.memory_space<vmem>>, vector<8x1xf32>
    %6 = vector.broadcast %5 : vector<8x1xf32> to vector<8x256xf32>
    %7 = arith.addf %4, %6 : vector<8x256xf32>
    %cst = arith.constant 0.000000e+00 : f32
    %8 = vector.broadcast %cst : f32 to vector<8x256xf32>
    %9 = arith.maximumf %7, %8 : vector<8x256xf32>
    %c0_6 = arith.constant 0 : index
    %c0_7 = arith.constant 0 : index
    %10 = vector.load %arg10[%c0_6, %c0_7] : memref<8x256xf32, #tpu.memory_space<vmem>>, vector<8x256xf32>
    tpu.vector_store %arg10[%c0_6, %c0_7], %9 {strides = array<i32>} : memref<8x256xf32, #tpu.memory_space<vmem>>, vector<8x256xf32>,
    %c0_8 = arith.constant 0 : index
    %c0_9 = arith.constant 0 : index
    %11 = vector.load %arg10[%c0_8, %c0_9] : memref<8x256xf32, #tpu.memory_space<vmem>>, vector<8x256xf32>
    %c17_i32 = arith.constant 17 : i32
    %12 = tpu.dynamic_rotate %11 by %c17_i32 dim 1 : vector<8x256xf32>, i32 -> vector<8x256xf32>
    %c0_10 = arith.constant 0 : index
    %c0_11 = arith.constant 0 : index
    %13 = vector.load %arg2[%c0_10, %c0_11] : memref<9x256xf32, #tpu.memory_space<vmem>>, vector<1x256xf32>
    %14 = vector.broadcast %13 : vector<1x256xf32> to vector<8x256xf32>
    %15 = arith.mulf %12, %14 : vector<8x256xf32>
    %c0_12 = arith.constant 0 : index
    %c0_13 = arith.constant 0 : index
    %c0_14 = arith.constant 0 : index
    %16 = vector.load %arg5[%c0_12, %c0_13, %c0_14] : memref<9x8x8xf32, #tpu.memory_space<vmem>>, vector<1x8x8xf32>
    %17 = vector.shape_cast %16 : vector<1x8x8xf32> to vector<8x8xf32>
    %cst_15 = arith.constant dense<0.000000e+00> : vector<8x256xf32>
    %18 = tpu.matmul %17, %15, %cst_15 {dimension_numbers = #tpu.dot_dimension_numbers<[1], [0], [0], [1], [0, 0, 1, 1], [], []>} : vector<8x8xf32>, vector<8x256xf32>, vector<8x256xf32> -> vector<8x256xf32>
    %c16_i32 = arith.constant 16 : i32
    %19 = tpu.dynamic_rotate %11 by %c16_i32 dim 1 : vector<8x256xf32>, i32 -> vector<8x256xf32>
    %c1 = arith.constant 1 : index
    %c0_16 = arith.constant 0 : index
    %20 = vector.load %arg2[%c1, %c0_16] : memref<9x256xf32, #tpu.memory_space<vmem>>, vector<1x256xf32>
    %21 = vector.broadcast %20 : vector<1x256xf32> to vector<8x256xf32>
    %22 = arith.mulf %19, %21 : vector<8x256xf32>
    %c1_17 = arith.constant 1 : index
    %c0_18 = arith.constant 0 : index
    %c0_19 = arith.constant 0 : index
    %23 = vector.load %arg5[%c1_17, %c0_18, %c0_19] : memref<9x8x8xf32, #tpu.memory_space<vmem>>, vector<1x8x8xf32>
    %24 = vector.shape_cast %23 : vector<1x8x8xf32> to vector<8x8xf32>
    %cst_20 = arith.constant dense<0.000000e+00> : vector<8x256xf32>
    %25 = tpu.matmul %24, %22, %cst_20 {dimension_numbers = #tpu.dot_dimension_numbers<[1], [0], [0], [1], [0, 0, 1, 1], [], []>} : vector<8x8xf32>, vector<8x256xf32>, vector<8x256xf32> -> vector<8x256xf32>
    %26 = arith.addf %18, %25 : vector<8x256xf32>
    %c15_i32 = arith.constant 15 : i32
    %27 = tpu.dynamic_rotate %11 by %c15_i32 dim 1 : vector<8x256xf32>, i32 -> vector<8x256xf32>
    %c2 = arith.constant 2 : index
    %c0_21 = arith.constant 0 : index
    %28 = vector.load %arg2[%c2, %c0_21] : memref<9x256xf32, #tpu.memory_space<vmem>>, vector<1x256xf32>
    %29 = vector.broadcast %28 : vector<1x256xf32> to vector<8x256xf32>
    %30 = arith.mulf %27, %29 : vector<8x256xf32>
    %c2_22 = arith.constant 2 : index
    %c0_23 = arith.constant 0 : index
    %c0_24 = arith.constant 0 : index
    %31 = vector.load %arg5[%c2_22, %c0_23, %c0_24] : memref<9x8x8xf32, #tpu.memory_space<vmem>>, vector<1x8x8xf32>
    %32 = vector.shape_cast %31 : vector<1x8x8xf32> to vector<8x8xf32>
    %cst_25 = arith.constant dense<0.000000e+00> : vector<8x256xf32>
    %33 = tpu.matmul %32, %30, %cst_25 {dimension_numbers = #tpu.dot_dimension_numbers<[1], [0], [0], [1], [0, 0, 1, 1], [], []>} : vector<8x8xf32>, vector<8x256xf32>, vector<8x256xf32> -> vector<8x256xf32>
    %34 = arith.addf %26, %33 : vector<8x256xf32>
    %c1_i32 = arith.constant 1 : i32
    %35 = tpu.dynamic_rotate %11 by %c1_i32 dim 1 : vector<8x256xf32>, i32 -> vector<8x256xf32>
    %c3 = arith.constant 3 : index
    %c0_26 = arith.constant 0 : index
    %36 = vector.load %arg2[%c3, %c0_26] : memref<9x256xf32, #tpu.memory_space<vmem>>, vector<1x256xf32>
    %37 = vector.broadcast %36 : vector<1x256xf32> to vector<8x256xf32>
    %38 = arith.mulf %35, %37 : vector<8x256xf32>
    %c3_27 = arith.constant 3 : index
    %c0_28 = arith.constant 0 : index
    %c0_29 = arith.constant 0 : index
    %39 = vector.load %arg5[%c3_27, %c0_28, %c0_29] : memref<9x8x8xf32, #tpu.memory_space<vmem>>, vector<1x8x8xf32>
    %40 = vector.shape_cast %39 : vector<1x8x8xf32> to vector<8x8xf32>
    %cst_30 = arith.constant dense<0.000000e+00> : vector<8x256xf32>
    %41 = tpu.matmul %40, %38, %cst_30 {dimension_numbers = #tpu.dot_dimension_numbers<[1], [0], [0], [1], [0, 0, 1, 1], [], []>} : vector<8x8xf32>, vector<8x256xf32>, vector<8x256xf32> -> vector<8x256xf32>
    %42 = arith.addf %34, %41 : vector<8x256xf32>
    %c4 = arith.constant 4 : index
    %c0_31 = arith.constant 0 : index
    %c0_32 = arith.constant 0 : index
    %43 = vector.load %arg5[%c4, %c0_31, %c0_32] : memref<9x8x8xf32, #tpu.memory_space<vmem>>, vector<1x8x8xf32>
    %44 = vector.shape_cast %43 : vector<1x8x8xf32> to vector<8x8xf32>
    %cst_33 = arith.constant dense<0.000000e+00> : vector<8x256xf32>
    %45 = tpu.matmul %44, %11, %cst_33 {dimension_numbers = #tpu.dot_dimension_numbers<[1], [0], [0], [1], [0, 0, 1, 1], [], []>} : vector<8x8xf32>, vector<8x256xf32>, vector<8x256xf32> -> vector<8x256xf32>
    %46 = arith.addf %42, %45 : vector<8x256xf32>
    %c255_i32 = arith.constant 255 : i32
    %47 = tpu.dynamic_rotate %11 by %c255_i32 dim 1 : vector<8x256xf32>, i32 -> vector<8x256xf32>
    %c5 = arith.constant 5 : index
    %c0_34 = arith.constant 0 : index
    %48 = vector.load %arg2[%c5, %c0_34] : memref<9x256xf32, #tpu.memory_space<vmem>>, vector<1x256xf32>
    %49 = vector.broadcast %48 : vector<1x256xf32> to vector<8x256xf32>
    %50 = arith.mulf %47, %49 : vector<8x256xf32>
    %c5_35 = arith.constant 5 : index
    %c0_36 = arith.constant 0 : index
    %c0_37 = arith.constant 0 : index
    %51 = vector.load %arg5[%c5_35, %c0_36, %c0_37] : memref<9x8x8xf32, #tpu.memory_space<vmem>>, vector<1x8x8xf32>
    %52 = vector.shape_cast %51 : vector<1x8x8xf32> to vector<8x8xf32>
    %cst_38 = arith.constant dense<0.000000e+00> : vector<8x256xf32>
    %53 = tpu.matmul %52, %50, %cst_38 {dimension_numbers = #tpu.dot_dimension_numbers<[1], [0], [0], [1], [0, 0, 1, 1], [], []>} : vector<8x8xf32>, vector<8x256xf32>, vector<8x256xf32> -> vector<8x256xf32>
    %54 = arith.addf %46, %53 : vector<8x256xf32>
    %c241_i32 = arith.constant 241 : i32
    %55 = tpu.dynamic_rotate %11 by %c241_i32 dim 1 : vector<8x256xf32>, i32 -> vector<8x256xf32>
    %c6 = arith.constant 6 : index
    %c0_39 = arith.constant 0 : index
    %56 = vector.load %arg2[%c6, %c0_39] : memref<9x256xf32, #tpu.memory_space<vmem>>, vector<1x256xf32>
    %57 = vector.broadcast %56 : vector<1x256xf32> to vector<8x256xf32>
    %58 = arith.mulf %55, %57 : vector<8x256xf32>
    %c6_40 = arith.constant 6 : index
    %c0_41 = arith.constant 0 : index
    %c0_42 = arith.constant 0 : index
    %59 = vector.load %arg5[%c6_40, %c0_41, %c0_42] : memref<9x8x8xf32, #tpu.memory_space<vmem>>, vector<1x8x8xf32>
    %60 = vector.shape_cast %59 : vector<1x8x8xf32> to vector<8x8xf32>
    %cst_43 = arith.constant dense<0.000000e+00> : vector<8x256xf32>
    %61 = tpu.matmul %60, %58, %cst_43 {dimension_numbers = #tpu.dot_dimension_numbers<[1], [0], [0], [1], [0, 0, 1, 1], [], []>} : vector<8x8xf32>, vector<8x256xf32>, vector<8x256xf32> -> vector<8x256xf32>
    %62 = arith.addf %54, %61 : vector<8x256xf32>
    %c240_i32 = arith.constant 240 : i32
    %63 = tpu.dynamic_rotate %11 by %c240_i32 dim 1 : vector<8x256xf32>, i32 -> vector<8x256xf32>
    %c7 = arith.constant 7 : index
    %c0_44 = arith.constant 0 : index
    %64 = vector.load %arg2[%c7, %c0_44] : memref<9x256xf32, #tpu.memory_space<vmem>>, vector<1x256xf32>
    %65 = vector.broadcast %64 : vector<1x256xf32> to vector<8x256xf32>
    %66 = arith.mulf %63, %65 : vector<8x256xf32>
    %c7_45 = arith.constant 7 : index
    %c0_46 = arith.constant 0 : index
    %c0_47 = arith.constant 0 : index
    %67 = vector.load %arg5[%c7_45, %c0_46, %c0_47] : memref<9x8x8xf32, #tpu.memory_space<vmem>>, vector<1x8x8xf32>
    %68 = vector.shape_cast %67 : vector<1x8x8xf32> to vector<8x8xf32>
    %cst_48 = arith.constant dense<0.000000e+00> : vector<8x256xf32>
    %69 = tpu.matmul %68, %66, %cst_48 {dimension_numbers = #tpu.dot_dimension_numbers<[1], [0], [0], [1], [0, 0, 1, 1], [], []>} : vector<8x8xf32>, vector<8x256xf32>, vector<8x256xf32> -> vector<8x256xf32>
    %70 = arith.addf %62, %69 : vector<8x256xf32>
    %c239_i32 = arith.constant 239 : i32
    %71 = tpu.dynamic_rotate %11 by %c239_i32 dim 1 : vector<8x256xf32>, i32 -> vector<8x256xf32>
    %c8 = arith.constant 8 : index
    %c0_49 = arith.constant 0 : index
    %72 = vector.load %arg2[%c8, %c0_49] : memref<9x256xf32, #tpu.memory_space<vmem>>, vector<1x256xf32>
    %73 = vector.broadcast %72 : vector<1x256xf32> to vector<8x256xf32>
    %74 = arith.mulf %71, %73 : vector<8x256xf32>
    %c8_50 = arith.constant 8 : index
    %c0_51 = arith.constant 0 : index
    %c0_52 = arith.constant 0 : index
    %75 = vector.load %arg5[%c8_50, %c0_51, %c0_52] : memref<9x8x8xf32, #tpu.memory_space<vmem>>, vector<1x8x8xf32>
    %76 = vector.shape_cast %75 : vector<1x8x8xf32> to vector<8x8xf32>
    %cst_53 = arith.constant dense<0.000000e+00> : vector<8x256xf32>
    %77 = tpu.matmul %76, %74, %cst_53 {dimension_numbers = #tpu.dot_dimension_numbers<[1], [0], [0], [1], [0, 0, 1, 1], [], []>} : vector<8x8xf32>, vector<8x256xf32>, vector<8x256xf32> -> vector<8x256xf32>
    %78 = arith.addf %70, %77 : vector<8x256xf32>
    %c0_54 = arith.constant 0 : index
    %c0_55 = arith.constant 0 : index
    %79 = vector.load %arg6[%c0_54, %c0_55] : memref<8x1xf32, #tpu.memory_space<vmem>>, vector<8x1xf32>
    %80 = vector.broadcast %79 : vector<8x1xf32> to vector<8x256xf32>
    %81 = arith.addf %78, %80 : vector<8x256xf32>
    %cst_56 = arith.constant 0.000000e+00 : f32
    %82 = vector.broadcast %cst_56 : f32 to vector<8x256xf32>
    %83 = arith.maximumf %81, %82 : vector<8x256xf32>
    %c0_57 = arith.constant 0 : index
    %c0_58 = arith.constant 0 : index
    %84 = vector.load %arg11[%c0_57, %c0_58] : memref<8x256xf32, #tpu.memory_space<vmem>>, vector<8x256xf32>
    tpu.vector_store %arg11[%c0_57, %c0_58], %83 {strides = array<i32>} : memref<8x256xf32, #tpu.memory_space<vmem>>, vector<8x256xf32>,
    %c0_59 = arith.constant 0 : index
    %c0_60 = arith.constant 0 : index
    %85 = vector.load %arg11[%c0_59, %c0_60] : memref<8x256xf32, #tpu.memory_space<vmem>>, vector<8x256xf32>
    %c0_61 = arith.constant 0 : index
    %c0_62 = arith.constant 0 : index
    %86 = vector.load %arg8[%c0_61, %c0_62] : memref<8x8xf32, #tpu.memory_space<vmem>>, vector<8x8xf32>
    %c0_63 = arith.constant 0 : index
    %c0_64 = arith.constant 0 : index
    %87 = vector.load %arg10[%c0_63, %c0_64] : memref<8x256xf32, #tpu.memory_space<vmem>>, vector<8x256xf32>
    %cst_65 = arith.constant dense<0.000000e+00> : vector<8x256xf32>
    %88 = tpu.matmul %86, %87, %cst_65 {dimension_numbers = #tpu.dot_dimension_numbers<[1], [0], [0], [1], [0, 0, 1, 1], [], []>} : vector<8x8xf32>, vector<8x256xf32>, vector<8x256xf32> -> vector<8x256xf32>
    %c17_i32_66 = arith.constant 17 : i32
    %89 = tpu.dynamic_rotate %85 by %c17_i32_66 dim 1 : vector<8x256xf32>, i32 -> vector<8x256xf32>
    %c0_67 = arith.constant 0 : index
    %c0_68 = arith.constant 0 : index
    %90 = vector.load %arg2[%c0_67, %c0_68] : memref<9x256xf32, #tpu.memory_space<vmem>>, vector<1x256xf32>
    %91 = vector.broadcast %90 : vector<1x256xf32> to vector<8x256xf32>
    %92 = arith.mulf %89, %91 : vector<8x256xf32>
    %c0_69 = arith.constant 0 : index
    %c0_70 = arith.constant 0 : index
    %c0_71 = arith.constant 0 : index
    %93 = vector.load %arg7[%c0_69, %c0_70, %c0_71] : memref<9x8x8xf32, #tpu.memory_space<vmem>>, vector<1x8x8xf32>
    %94 = vector.shape_cast %93 : vector<1x8x8xf32> to vector<8x8xf32>
    %cst_72 = arith.constant dense<0.000000e+00> : vector<8x256xf32>
    %95 = tpu.matmul %94, %92, %cst_72 {dimension_numbers = #tpu.dot_dimension_numbers<[1], [0], [0], [1], [0, 0, 1, 1], [], []>} : vector<8x8xf32>, vector<8x256xf32>, vector<8x256xf32> -> vector<8x256xf32>
    %96 = arith.addf %88, %95 : vector<8x256xf32>
    %c16_i32_73 = arith.constant 16 : i32
    %97 = tpu.dynamic_rotate %85 by %c16_i32_73 dim 1 : vector<8x256xf32>, i32 -> vector<8x256xf32>
    %c1_74 = arith.constant 1 : index
    %c0_75 = arith.constant 0 : index
    %98 = vector.load %arg2[%c1_74, %c0_75] : memref<9x256xf32, #tpu.memory_space<vmem>>, vector<1x256xf32>
    %99 = vector.broadcast %98 : vector<1x256xf32> to vector<8x256xf32>
    %100 = arith.mulf %97, %99 : vector<8x256xf32>
    %c1_76 = arith.constant 1 : index
    %c0_77 = arith.constant 0 : index
    %c0_78 = arith.constant 0 : index
    %101 = vector.load %arg7[%c1_76, %c0_77, %c0_78] : memref<9x8x8xf32, #tpu.memory_space<vmem>>, vector<1x8x8xf32>
    %102 = vector.shape_cast %101 : vector<1x8x8xf32> to vector<8x8xf32>
    %cst_79 = arith.constant dense<0.000000e+00> : vector<8x256xf32>
    %103 = tpu.matmul %102, %100, %cst_79 {dimension_numbers = #tpu.dot_dimension_numbers<[1], [0], [0], [1], [0, 0, 1, 1], [], []>} : vector<8x8xf32>, vector<8x256xf32>, vector<8x256xf32> -> vector<8x256xf32>
    %104 = arith.addf %96, %103 : vector<8x256xf32>
    %c15_i32_80 = arith.constant 15 : i32
    %105 = tpu.dynamic_rotate %85 by %c15_i32_80 dim 1 : vector<8x256xf32>, i32 -> vector<8x256xf32>
    %c2_81 = arith.constant 2 : index
    %c0_82 = arith.constant 0 : index
    %106 = vector.load %arg2[%c2_81, %c0_82] : memref<9x256xf32, #tpu.memory_space<vmem>>, vector<1x256xf32>
    %107 = vector.broadcast %106 : vector<1x256xf32> to vector<8x256xf32>
    %108 = arith.mulf %105, %107 : vector<8x256xf32>
    %c2_83 = arith.constant 2 : index
    %c0_84 = arith.constant 0 : index
    %c0_85 = arith.constant 0 : index
    %109 = vector.load %arg7[%c2_83, %c0_84, %c0_85] : memref<9x8x8xf32, #tpu.memory_space<vmem>>, vector<1x8x8xf32>
    %110 = vector.shape_cast %109 : vector<1x8x8xf32> to vector<8x8xf32>
    %cst_86 = arith.constant dense<0.000000e+00> : vector<8x256xf32>
    %111 = tpu.matmul %110, %108, %cst_86 {dimension_numbers = #tpu.dot_dimension_numbers<[1], [0], [0], [1], [0, 0, 1, 1], [], []>} : vector<8x8xf32>, vector<8x256xf32>, vector<8x256xf32> -> vector<8x256xf32>
    %112 = arith.addf %104, %111 : vector<8x256xf32>
    %c1_i32_87 = arith.constant 1 : i32
    %113 = tpu.dynamic_rotate %85 by %c1_i32_87 dim 1 : vector<8x256xf32>, i32 -> vector<8x256xf32>
    %c3_88 = arith.constant 3 : index
    %c0_89 = arith.constant 0 : index
    %114 = vector.load %arg2[%c3_88, %c0_89] : memref<9x256xf32, #tpu.memory_space<vmem>>, vector<1x256xf32>
    %115 = vector.broadcast %114 : vector<1x256xf32> to vector<8x256xf32>
    %116 = arith.mulf %113, %115 : vector<8x256xf32>
    %c3_90 = arith.constant 3 : index
    %c0_91 = arith.constant 0 : index
    %c0_92 = arith.constant 0 : index
    %117 = vector.load %arg7[%c3_90, %c0_91, %c0_92] : memref<9x8x8xf32, #tpu.memory_space<vmem>>, vector<1x8x8xf32>
    %118 = vector.shape_cast %117 : vector<1x8x8xf32> to vector<8x8xf32>
    %cst_93 = arith.constant dense<0.000000e+00> : vector<8x256xf32>
    %119 = tpu.matmul %118, %116, %cst_93 {dimension_numbers = #tpu.dot_dimension_numbers<[1], [0], [0], [1], [0, 0, 1, 1], [], []>} : vector<8x8xf32>, vector<8x256xf32>, vector<8x256xf32> -> vector<8x256xf32>
    %120 = arith.addf %112, %119 : vector<8x256xf32>
    %c4_94 = arith.constant 4 : index
    %c0_95 = arith.constant 0 : index
    %c0_96 = arith.constant 0 : index
    %121 = vector.load %arg7[%c4_94, %c0_95, %c0_96] : memref<9x8x8xf32, #tpu.memory_space<vmem>>, vector<1x8x8xf32>
    %122 = vector.shape_cast %121 : vector<1x8x8xf32> to vector<8x8xf32>
    %cst_97 = arith.constant dense<0.000000e+00> : vector<8x256xf32>
    %123 = tpu.matmul %122, %85, %cst_97 {dimension_numbers = #tpu.dot_dimension_numbers<[1], [0], [0], [1], [0, 0, 1, 1], [], []>} : vector<8x8xf32>, vector<8x256xf32>, vector<8x256xf32> -> vector<8x256xf32>
    %124 = arith.addf %120, %123 : vector<8x256xf32>
    %c255_i32_98 = arith.constant 255 : i32
    %125 = tpu.dynamic_rotate %85 by %c255_i32_98 dim 1 : vector<8x256xf32>, i32 -> vector<8x256xf32>
    %c5_99 = arith.constant 5 : index
    %c0_100 = arith.constant 0 : index
    %126 = vector.load %arg2[%c5_99, %c0_100] : memref<9x256xf32, #tpu.memory_space<vmem>>, vector<1x256xf32>
    %127 = vector.broadcast %126 : vector<1x256xf32> to vector<8x256xf32>
    %128 = arith.mulf %125, %127 : vector<8x256xf32>
    %c5_101 = arith.constant 5 : index
    %c0_102 = arith.constant 0 : index
    %c0_103 = arith.constant 0 : index
    %129 = vector.load %arg7[%c5_101, %c0_102, %c0_103] : memref<9x8x8xf32, #tpu.memory_space<vmem>>, vector<1x8x8xf32>
    %130 = vector.shape_cast %129 : vector<1x8x8xf32> to vector<8x8xf32>
    %cst_104 = arith.constant dense<0.000000e+00> : vector<8x256xf32>
    %131 = tpu.matmul %130, %128, %cst_104 {dimension_numbers = #tpu.dot_dimension_numbers<[1], [0], [0], [1], [0, 0, 1, 1], [], []>} : vector<8x8xf32>, vector<8x256xf32>, vector<8x256xf32> -> vector<8x256xf32>
    %132 = arith.addf %124, %131 : vector<8x256xf32>
    %c241_i32_105 = arith.constant 241 : i32
    %133 = tpu.dynamic_rotate %85 by %c241_i32_105 dim 1 : vector<8x256xf32>, i32 -> vector<8x256xf32>
    %c6_106 = arith.constant 6 : index
    %c0_107 = arith.constant 0 : index
    %134 = vector.load %arg2[%c6_106, %c0_107] : memref<9x256xf32, #tpu.memory_space<vmem>>, vector<1x256xf32>
    %135 = vector.broadcast %134 : vector<1x256xf32> to vector<8x256xf32>
    %136 = arith.mulf %133, %135 : vector<8x256xf32>
    %c6_108 = arith.constant 6 : index
    %c0_109 = arith.constant 0 : index
    %c0_110 = arith.constant 0 : index
    %137 = vector.load %arg7[%c6_108, %c0_109, %c0_110] : memref<9x8x8xf32, #tpu.memory_space<vmem>>, vector<1x8x8xf32>
    %138 = vector.shape_cast %137 : vector<1x8x8xf32> to vector<8x8xf32>
    %cst_111 = arith.constant dense<0.000000e+00> : vector<8x256xf32>
    %139 = tpu.matmul %138, %136, %cst_111 {dimension_numbers = #tpu.dot_dimension_numbers<[1], [0], [0], [1], [0, 0, 1, 1], [], []>} : vector<8x8xf32>, vector<8x256xf32>, vector<8x256xf32> -> vector<8x256xf32>
    %140 = arith.addf %132, %139 : vector<8x256xf32>
    %c240_i32_112 = arith.constant 240 : i32
    %141 = tpu.dynamic_rotate %85 by %c240_i32_112 dim 1 : vector<8x256xf32>, i32 -> vector<8x256xf32>
    %c7_113 = arith.constant 7 : index
    %c0_114 = arith.constant 0 : index
    %142 = vector.load %arg2[%c7_113, %c0_114] : memref<9x256xf32, #tpu.memory_space<vmem>>, vector<1x256xf32>
    %143 = vector.broadcast %142 : vector<1x256xf32> to vector<8x256xf32>
    %144 = arith.mulf %141, %143 : vector<8x256xf32>
    %c7_115 = arith.constant 7 : index
    %c0_116 = arith.constant 0 : index
    %c0_117 = arith.constant 0 : index
    %145 = vector.load %arg7[%c7_115, %c0_116, %c0_117] : memref<9x8x8xf32, #tpu.memory_space<vmem>>, vector<1x8x8xf32>
    %146 = vector.shape_cast %145 : vector<1x8x8xf32> to vector<8x8xf32>
    %cst_118 = arith.constant dense<0.000000e+00> : vector<8x256xf32>
    %147 = tpu.matmul %146, %144, %cst_118 {dimension_numbers = #tpu.dot_dimension_numbers<[1], [0], [0], [1], [0, 0, 1, 1], [], []>} : vector<8x8xf32>, vector<8x256xf32>, vector<8x256xf32> -> vector<8x256xf32>
    %148 = arith.addf %140, %147 : vector<8x256xf32>
    %c239_i32_119 = arith.constant 239 : i32
    %149 = tpu.dynamic_rotate %85 by %c239_i32_119 dim 1 : vector<8x256xf32>, i32 -> vector<8x256xf32>
    %c8_120 = arith.constant 8 : index
    %c0_121 = arith.constant 0 : index
    %150 = vector.load %arg2[%c8_120, %c0_121] : memref<9x256xf32, #tpu.memory_space<vmem>>, vector<1x256xf32>
    %151 = vector.broadcast %150 : vector<1x256xf32> to vector<8x256xf32>
    %152 = arith.mulf %149, %151 : vector<8x256xf32>
    %c8_122 = arith.constant 8 : index
    %c0_123 = arith.constant 0 : index
    %c0_124 = arith.constant 0 : index
    %153 = vector.load %arg7[%c8_122, %c0_123, %c0_124] : memref<9x8x8xf32, #tpu.memory_space<vmem>>, vector<1x8x8xf32>
    %154 = vector.shape_cast %153 : vector<1x8x8xf32> to vector<8x8xf32>
    %cst_125 = arith.constant dense<0.000000e+00> : vector<8x256xf32>
    %155 = tpu.matmul %154, %152, %cst_125 {dimension_numbers = #tpu.dot_dimension_numbers<[1], [0], [0], [1], [0, 0, 1, 1], [], []>} : vector<8x8xf32>, vector<8x256xf32>, vector<8x256xf32> -> vector<8x256xf32>
    %156 = arith.addf %148, %155 : vector<8x256xf32>
    %c0_126 = arith.constant 0 : index
    %c0_127 = arith.constant 0 : index
    %c0_128 = arith.constant 0 : index
    %157 = vector.load %arg9[%c0_126, %c0_127, %c0_128] : memref<1x8x256xf32, #tpu.memory_space<vmem>>, vector<1x8x256xf32>
    %158 = vector.shape_cast %157 : vector<1x8x256xf32> to vector<8x256xf32>
    %159 = vector.shape_cast %156 : vector<8x256xf32> to vector<1x8x256xf32>
    tpu.vector_store %arg9[%c0_126, %c0_127, %c0_128], %159 {strides = array<i32>} : memref<1x8x256xf32, #tpu.memory_space<vmem>>, vector<1x8x256xf32>,
    return
  }
  func.func @transform_0(%arg0: i32) -> (i32, i32, i32) {
    %c0_i32 = arith.constant 0 : i32
    %c0_i32_0 = arith.constant 0 : i32
    %c0_i32_1 = arith.constant 0 : i32
    return %arg0, %c0_i32, %c0_i32_0 : i32, i32, i32
  }
  func.func @transform_1(%arg0: i32) -> (i32, i32) {
    %c0_i32 = arith.constant 0 : i32
    %c0_i32_0 = arith.constant 0 : i32
    %c0_i32_1 = arith.constant 0 : i32
    return %c0_i32, %c0_i32_0 : i32, i32
  }
  func.func @transform_2(%arg0: i32) -> (i32, i32) {
    %c0_i32 = arith.constant 0 : i32
    %c0_i32_0 = arith.constant 0 : i32
    %c0_i32_1 = arith.constant 0 : i32
    return %c0_i32, %c0_i32_0 : i32, i32
  }
  func.func @transform_3(%arg0: i32) -> (i32, i32) {
    %c0_i32 = arith.constant 0 : i32
    %c0_i32_0 = arith.constant 0 : i32
    %c0_i32_1 = arith.constant 0 : i32
    return %c0_i32, %c0_i32_0 : i32, i32
  }
  func.func @transform_4(%arg0: i32) -> (i32, i32, i32) {
    %c0_i32 = arith.constant 0 : i32
    %c0_i32_0 = arith.constant 0 : i32
    %c0_i32_1 = arith.constant 0 : i32
    %c0_i32_2 = arith.constant 0 : i32
    return %c0_i32, %c0_i32_0, %c0_i32_1 : i32, i32, i32
  }
  func.func @transform_5(%arg0: i32) -> (i32, i32) {
    %c0_i32 = arith.constant 0 : i32
    %c0_i32_0 = arith.constant 0 : i32
    %c0_i32_1 = arith.constant 0 : i32
    return %c0_i32, %c0_i32_0 : i32, i32
  }
  func.func @transform_6(%arg0: i32) -> (i32, i32, i32) {
    %c0_i32 = arith.constant 0 : i32
    %c0_i32_0 = arith.constant 0 : i32
    %c0_i32_1 = arith.constant 0 : i32
    %c0_i32_2 = arith.constant 0 : i32
    return %c0_i32, %c0_i32_0, %c0_i32_1 : i32, i32, i32
  }
  func.func @transform_7(%arg0: i32) -> (i32, i32) {
    %c0_i32 = arith.constant 0 : i32
    %c0_i32_0 = arith.constant 0 : i32
    %c0_i32_1 = arith.constant 0 : i32
    return %c0_i32, %c0_i32_0 : i32, i32
  }
  func.func @transform_8(%arg0: i32) -> (i32, i32, i32) {
    %c0_i32 = arith.constant 0 : i32
    %c0_i32_0 = arith.constant 0 : i32
    %c0_i32_1 = arith.constant 0 : i32
    return %arg0, %c0_i32, %c0_i32_0 : i32, i32, i32
  }
}

</mosaic_0001>

<llo_original>
// kernel: tpu_custom_call.1
$region0: #{tpu_custom_call.1}
  #allocation0 [shape = 'u32[]', space=smem, size = 0x4, offset = 0x4, fixed_abs, tag = 'smem constant byte address 0x4 - core index']
  #allocation1 [shape = 'u32[72,128]{1,0:T(1,128)}', space=vmem, size = 0x9000, scoped, tag = 'internal scratch']
  #allocation2 [shape = 'f32[8,256]{1,0:T(8,128)}', space=vmem, size = 0x2000, scoped, tag = 'scratch operand']
  #allocation3 [shape = 'f32[8,256]{1,0:T(8,128)}', space=vmem, size = 0x2000, scoped, tag = 'scratch operand']
  %s0 = inlined_call_operand.vmem [shape: f32[2,8,256], index: 0, kind: input, shape index: {}]
  %s1 = inlined_call_operand.vmem [shape: f32[9,256], index: 1, kind: input, shape index: {}]
  %s2 = inlined_call_operand.vmem [shape: f32[8,1], index: 2, kind: input, shape index: {}]
  %s3 = inlined_call_operand.vmem [shape: f32[8,1], index: 3, kind: input, shape index: {}]
  %s4 = inlined_call_operand.vmem [shape: f32[9,8,8], index: 4, kind: input, shape index: {}]
  %s5 = inlined_call_operand.vmem [shape: f32[8,1], index: 5, kind: input, shape index: {}]
  %s6 = inlined_call_operand.vmem [shape: f32[9,8,8], index: 6, kind: input, shape index: {}]
  %s7 = inlined_call_operand.vmem [shape: f32[8,8], index: 7, kind: input, shape index: {}]
  %s8 = inlined_call_operand.hbm [shape: f32[2,8,256], index: 8, kind: output, shape index: {}]
  %s9 = sld [smem:[#allocation0]]
  $region65: #{tpu_custom_call.1} parent=0
    _
  %s11 = ssub.s32 1, %s9
  %s12 = scalar_select 0, %s11, %s9
  $region1: #{tpu_custom_call.1} parent=0
    #allocation4 [shape = 'u8[16384]{0}', space=vmem, size = 0x4000, scoped, tag = 'output window, operand 0']
    #allocation5 [shape = 's32[2]{0}', space=sflag, size = 0x8, scoped, tag = 'scoped memory for tpu_custom_call.1']
    %13 = vsyncpa [#allocation5], 0
    %s14 = scalar_lea.sflag [#allocation5], 1
    %15 = vsyncpa %s14, 0
    loop: start=0, step=1, limit=4
    $region2: #{tpu_custom_call.1} parent=1 // loop_pre_header
      _
    $region3: #{tpu_custom_call.1} parent=1 // loop_header
      %s17 = sphi 0, %s21
      %p18 = scmp.ge.s32.totalorder %s17, 4
      %s27 = sphi 0, %s29
      %s30 = sphi 0, %s27
      %s31 = sphi 0, %s30
      %s47 = sphi 0, %s31
      %s51 = sphi 0, %s51
      %s53 = sphi 0, %s51
      %s54 = sphi 0, %s53
      %s68 = sphi 0, %s54
      %s72 = sphi 0, %s72
      %s74 = sphi 0, %s72
      %s75 = sphi 0, %s74
      %s89 = sphi 0, %s75
      %s93 = sphi 0, %s93
      %s95 = sphi 0, %s93
      %s96 = sphi 0, %s95
      %s110 = sphi 0, %s96
      %s114 = sphi 0, %s114
      %s116 = sphi 0, %s114
      %s117 = sphi 0, %s116
      %s131 = sphi 0, %s117
      %s135 = sphi 0, %s135
      %s137 = sphi 0, %s135
      %s138 = sphi 0, %s137
      %s152 = sphi 0, %s138
      %s156 = sphi 0, %s156
      %s158 = sphi 0, %s156
      %s159 = sphi 0, %s158
      %s173 = sphi 0, %s159
      %s177 = sphi 0, %s177
      %s179 = sphi 0, %s177
      %s180 = sphi 0, %s179
      %s194 = sphi 0, %s180
      %s200 = sphi 0, %s202
      %s203 = sphi 0, %s200
      %s204 = sphi 0, %s203
      %s220 = sphi 0, %s204
    $region4: #{tpu_custom_call.1} parent=1 // loop_header_branch
      %20 = sbr.rel (%p18) target = $region8
    $region5: #{tpu_custom_call.1} parent=1 // loop_body
      %s22 = ssub.s32 %s17, 1
      %s23 = ssub.s32 %s17, 2
      %s24 = sadd.s32 %s17, 1
      %s25 = ssub.s32 %s17, %s24
      %p26 = scmp.eq.s32.totalorder %s25, 0
      %s28 = sadd.s32 %s27, 1
      %s29 = scalar_select %p26, %s27, %s28
      %p32 = pneg %p26
      %p33 = scmp.eq.s32.totalorder %s17, 1
      %p34 = por %p32, %p33
      %p35 = scmp.ne.s32.totalorder %s27, %s30
      %p36 = scmp.eq.s32.totalorder %s17, 0
      %p37 = por %p35, %p36
      %p38 = scmp.ne.s32.totalorder %s27, %s30
      %p39 = scmp.eq.s32.totalorder %s22, 1
      %p40 = por %p38, %p39
      %p41 = scmp.ne.s32.totalorder %s30, %s31
      %p42 = scmp.eq.s32.totalorder %s22, 0
      %p43 = por %p41, %p42
      %p44 = scmp.ne.s32.totalorder %s30, %s31
      %p45 = scmp.eq.s32.totalorder %s23, 1
      %p46 = por %p44, %p45
      %p48 = scmp.ne.s32.totalorder %s31, %s47
      %p49 = scmp.eq.s32.totalorder %s23, 0
      %p50 = por %p48, %p49
      %s52 = sadd.s32 %s51, 1
      %p55 = scmp.eq.s32.totalorder %s17, 1
      %p56 = scmp.ne.s32.totalorder %s51, %s53
      %p57 = scmp.eq.s32.totalorder %s17, 0
      %p58 = por %p56, %p57
      %p59 = scmp.ne.s32.totalorder %s51, %s53
      %p60 = scmp.eq.s32.totalorder %s22, 1
      %p61 = por %p59, %p60
      %p62 = scmp.ne.s32.totalorder %s53, %s54
      %p63 = scmp.eq.s32.totalorder %s22, 0
      %p64 = por %p62, %p63
      %p65 = scmp.ne.s32.totalorder %s53, %s54
      %p66 = scmp.eq.s32.totalorder %s23, 1
      %p67 = por %p65, %p66
      %p69 = scmp.ne.s32.totalorder %s54, %s68
      %p70 = scmp.eq.s32.totalorder %s23, 0
      %p71 = por %p69, %p70
      %s73 = sadd.s32 %s72, 1
      %p76 = scmp.eq.s32.totalorder %s17, 1
      %p77 = scmp.ne.s32.totalorder %s72, %s74
      %p78 = scmp.eq.s32.totalorder %s17, 0
      %p79 = por %p77, %p78
      %p80 = scmp.ne.s32.totalorder %s72, %s74
      %p81 = scmp.eq.s32.totalorder %s22, 1
      %p82 = por %p80, %p81
      %p83 = scmp.ne.s32.totalorder %s74, %s75
      %p84 = scmp.eq.s32.totalorder %s22, 0
      %p85 = por %p83, %p84
      %p86 = scmp.ne.s32.totalorder %s74, %s75
      %p87 = scmp.eq.s32.totalorder %s23, 1
      %p88 = por %p86, %p87
      %p90 = scmp.ne.s32.totalorder %s75, %s89
      %p91 = scmp.eq.s32.totalorder %s23, 0
      %p92 = por %p90, %p91
      %s94 = sadd.s32 %s93, 1
      %p97 = scmp.eq.s32.totalorder %s17, 1
      %p98 = scmp.ne.s32.totalorder %s93, %s95
      %p99 = scmp.eq.s32.totalorder %s17, 0
      %p100 = por %p98, %p99
      %p101 = scmp.ne.s32.totalorder %s93, %s95
      %p102 = scmp.eq.s32.totalorder %s22, 1
      %p103 = por %p101, %p102
      %p104 = scmp.ne.s32.totalorder %s95, %s96
      %p105 = scmp.eq.s32.totalorder %s22, 0
      %p106 = por %p104, %p105
      %p107 = scmp.ne.s32.totalorder %s95, %s96
      %p108 = scmp.eq.s32.totalorder %s23, 1
      %p109 = por %p107, %p108
      %p111 = scmp.ne.s32.totalorder %s96, %s110
      %p112 = scmp.eq.s32.totalorder %s23, 0
      %p113 = por %p111, %p112
      %s115 = sadd.s32 %s114, 1
      %p118 = scmp.eq.s32.totalorder %s17, 1
      %p119 = scmp.ne.s32.totalorder %s114, %s116
      %p120 = scmp.eq.s32.totalorder %s17, 0
      %p121 = por %p119, %p120
      %p122 = scmp.ne.s32.totalorder %s114, %s116
      %p123 = scmp.eq.s32.totalorder %s22, 1
      %p124 = por %p122, %p123
      %p125 = scmp.ne.s32.totalorder %s116, %s117
      %p126 = scmp.eq.s32.totalorder %s22, 0
      %p127 = por %p125, %p126
      %p128 = scmp.ne.s32.totalorder %s116, %s117
      %p129 = scmp.eq.s32.totalorder %s23, 1
      %p130 = por %p128, %p129
      %p132 = scmp.ne.s32.totalorder %s117, %s131
      %p133 = scmp.eq.s32.totalorder %s23, 0
      %p134 = por %p132, %p133
      %s136 = sadd.s32 %s135, 1
      %p139 = scmp.eq.s32.totalorder %s17, 1
      %p140 = scmp.ne.s32.totalorder %s135, %s137
      %p141 = scmp.eq.s32.totalorder %s17, 0
      %p142 = por %p140, %p141
      %p143 = scmp.ne.s32.totalorder %s135, %s137
      %p144 = scmp.eq.s32.totalorder %s22, 1
      %p145 = por %p143, %p144
      %p146 = scmp.ne.s32.totalorder %s137, %s138
      %p147 = scmp.eq.s32.totalorder %s22, 0
      %p148 = por %p146, %p147
      %p149 = scmp.ne.s32.totalorder %s137, %s138
      %p150 = scmp.eq.s32.totalorder %s23, 1
      %p151 = por %p149, %p150
      %p153 = scmp.ne.s32.totalorder %s138, %s152
      %p154 = scmp.eq.s32.totalorder %s23, 0
      %p155 = por %p153, %p154
      %s157 = sadd.s32 %s156, 1
      %p160 = scmp.eq.s32.totalorder %s17, 1
      %p161 = scmp.ne.s32.totalorder %s156, %s158
      %p162 = scmp.eq.s32.totalorder %s17, 0
      %p163 = por %p161, %p162
      %p164 = scmp.ne.s32.totalorder %s156, %s158
      %p165 = scmp.eq.s32.totalorder %s22, 1
      %p166 = por %p164, %p165
      %p167 = scmp.ne.s32.totalorder %s158, %s159
      %p168 = scmp.eq.s32.totalorder %s22, 0
      %p169 = por %p167, %p168
      %p170 = scmp.ne.s32.totalorder %s158, %s159
      %p171 = scmp.eq.s32.totalorder %s23, 1
      %p172 = por %p170, %p171
      %p174 = scmp.ne.s32.totalorder %s159, %s173
      %p175 = scmp.eq.s32.totalorder %s23, 0
      %p176 = por %p174, %p175
      %s178 = sadd.s32 %s177, 1
      %p181 = scmp.eq.s32.totalorder %s17, 1
      %p182 = scmp.ne.s32.totalorder %s177, %s179
      %p183 = scmp.eq.s32.totalorder %s17, 0
      %p184 = por %p182, %p183
      %p185 = scmp.ne.s32.totalorder %s177, %s179
      %p186 = scmp.eq.s32.totalorder %s22, 1
      %p187 = por %p185, %p186
      %p188 = scmp.ne.s32.totalorder %s179, %s180
      %p189 = scmp.eq.s32.totalorder %s22, 0
      %p190 = por %p188, %p189
      %p191 = scmp.ne.s32.totalorder %s179, %s180
      %p192 = scmp.eq.s32.totalorder %s23, 1
      %p193 = por %p191, %p192
      %p195 = scmp.ne.s32.totalorder %s180, %s194
      %p196 = scmp.eq.s32.totalorder %s23, 0
      %p197 = por %p195, %p196
      %s198 = ssub.s32 %s17, %s24
      %p199 = scmp.eq.s32.totalorder %s198, 0
      %s201 = sadd.s32 %s200, 1
      %s202 = scalar_select %p199, %s200, %s201
      %p205 = pneg %p199
      %p206 = scmp.eq.s32.totalorder %s17, 1
      %p207 = por %p205, %p206
      %p208 = scmp.ne.s32.totalorder %s200, %s203
      %p209 = scmp.eq.s32.totalorder %s17, 0
      %p210 = por %p208, %p209
      %p211 = scmp.ne.s32.totalorder %s200, %s203
      %p212 = scmp.eq.s32.totalorder %s22, 1
      %p213 = por %p211, %p212
      %p214 = scmp.ne.s32.totalorder %s203, %s204
      %p215 = scmp.eq.s32.totalorder %s22, 0
      %p216 = por %p214, %p215
      %p217 = scmp.ne.s32.totalorder %s203, %s204
      %p218 = scmp.eq.s32.totalorder %s23, 1
      %p219 = por %p217, %p218
      %p221 = scmp.ne.s32.totalorder %s204, %s220
      %p222 = scmp.eq.s32.totalorder %s23, 0
      %p223 = por %p221, %p222
      %p224 = scmp.le.s32.totalorder 1, %s17
      %p225 = scmp.lt.s32.totalorder %s17, 3
      %p226 = pnand %p224, %p225
      %p227 = pneg %p226
      // Predicated region
      $region9: #{tpu_custom_call.1} parent=5 // pred_check
        _
      $region10: #{tpu_custom_call.1} parent=5 // pred_check_branch
        %229 = sbr.rel (%p226) target = $region12
      $region11: #{tpu_custom_call.1} parent=5 // pred_region
        %s230 = ssub.s32 %s17, 1
        // Predicated region
        $region13: #{tpu_custom_call.1} parent=11 // pred_check
          %p231 = pneg %p64
        $region14: #{tpu_custom_call.1} parent=11 // pred_check_branch
          %233 = sbr.rel (%p231) target = $region16
        $region15: #{tpu_custom_call.1} parent=11 // pred_region
          _
        $region16: #{tpu_custom_call.1} parent=11 // pred_fallthru
          _
        // Predicated region
        $region17: #{tpu_custom_call.1} parent=11 // pred_check
          %p234 = pneg %p85
        $region18: #{tpu_custom_call.1} parent=11 // pred_check_branch
          %236 = sbr.rel (%p234) target = $region20
        $region19: #{tpu_custom_call.1} parent=11 // pred_region
          _
        $region20: #{tpu_custom_call.1} parent=11 // pred_fallthru
          _
        // Predicated region
        $region21: #{tpu_custom_call.1} parent=11 // pred_check
          %p237 = pneg %p106
        $region22: #{tpu_custom_call.1} parent=11 // pred_check_branch
          %239 = sbr.rel (%p237) target = $region24
        $region23: #{tpu_custom_call.1} parent=11 // pred_region
          _
        $region24: #{tpu_custom_call.1} parent=11 // pred_fallthru
          _
        // Predicated region
        $region25: #{tpu_custom_call.1} parent=11 // pred_check
          %p240 = pneg %p127
        $region26: #{tpu_custom_call.1} parent=11 // pred_check_branch
          %242 = sbr.rel (%p240) target = $region28
        $region27: #{tpu_custom_call.1} parent=11 // pred_region
          _
        $region28: #{tpu_custom_call.1} parent=11 // pred_fallthru
          _
        // Predicated region
        $region29: #{tpu_custom_call.1} parent=11 // pred_check
          %p243 = pneg %p148
        $region30: #{tpu_custom_call.1} parent=11 // pred_check_branch
          %245 = sbr.rel (%p243) target = $region32
        $region31: #{tpu_custom_call.1} parent=11 // pred_region
          _
        $region32: #{tpu_custom_call.1} parent=11 // pred_fallthru
          _
        // Predicated region
        $region33: #{tpu_custom_call.1} parent=11 // pred_check
          %p246 = pneg %p169
        $region34: #{tpu_custom_call.1} parent=11 // pred_check_branch
          %248 = sbr.rel (%p246) target = $region36
        $region35: #{tpu_custom_call.1} parent=11 // pred_region
          _
        $region36: #{tpu_custom_call.1} parent=11 // pred_fallthru
          _
        // Predicated region
        $region37: #{tpu_custom_call.1} parent=11 // pred_check
          %p249 = pneg %p190
        $region38: #{tpu_custom_call.1} parent=11 // pred_check_branch
          %251 = sbr.rel (%p249) target = $region40
        $region39: #{tpu_custom_call.1} parent=11 // pred_region
          _
        $region40: #{tpu_custom_call.1} parent=11 // pred_fallthru
          _
      $region12: #{tpu_custom_call.1} parent=5 // pred_fallthru
        _
      %p252 = scmp.lt.s32.totalorder %s17, 2
      // Predicated region
      $region41: #{tpu_custom_call.1} parent=5 // pred_check
        %p253 = pneg %p252
      $region42: #{tpu_custom_call.1} parent=5 // pred_check_branch
        %255 = sbr.rel (%p253) target = $region44
      $region43: #{tpu_custom_call.1} parent=5 // pred_region
        // Predicated region
        $region45: #{tpu_custom_call.1} parent=43 // pred_check
          %p256 = pneg %p37
        $region46: #{tpu_custom_call.1} parent=43 // pred_check_branch
          %258 = sbr.rel (%p256) target = $region48
        $region47: #{tpu_custom_call.1} parent=43 // pred_region
          %p259 = scmp.lt.s32.totalorder %s17, 1
          %s260 = scalar_select %p259, %s17, 1
          %s261 = smul.addr %s260, 2
          %s262 = smul.addr %s261, 8
          %s263 = scalar_lea.vmem %s0, %s262
        $region48: #{tpu_custom_call.1} parent=43 // pred_fallthru
          _
      $region44: #{tpu_custom_call.1} parent=5 // pred_fallthru
        _
      %p264 = scmp.le.s32.totalorder 1, %s17
      %p265 = scmp.lt.s32.totalorder %s17, 3
      %p266 = pnand %p264, %p265
      %p267 = pneg %p266
      // Predicated region
      $region49: #{tpu_custom_call.1} parent=5 // pred_check
        _
      $region50: #{tpu_custom_call.1} parent=5 // pred_check_branch
        %269 = sbr.rel (%p266) target = $region52
      $region51: #{tpu_custom_call.1} parent=5 // pred_region
        %s270 = ssub.s32 %s17, 1
        %p271 = scmp.lt.s32.totalorder %s22, 1
        %s272 = scalar_select %p271, %s22, 1
        %s273 = smul.addr %s272, 2
        %s274 = smul.addr %s273, 8
        %s275 = scalar_lea.vmem %s0, %s274
        %p276 = pneg %p43
        %p277 = pneg %p40
        %p278 = pneg %p64
        %p279 = pneg %p61
        %p280 = pneg %p85
        %p281 = pneg %p82
        %p282 = pneg %p106
        %p283 = pneg %p103
        %p284 = pneg %p127
        %p285 = pneg %p124
        %p286 = pneg %p148
        %p287 = pneg %p145
        %p288 = pneg %p169
        %p289 = pneg %p166
        %p290 = pneg %p190
        %p291 = pneg %p187
        %p292 = pneg %p216
        %p293 = pneg %p213
        %s294 = sand.u32 %s203, 1
        %s295 = scalar_lea.sflag [#allocation5], %s294
        %s296 = sand.u32 %s203, 1
        %s297 = smul.addr %s296, 16
        %s298 = scalar_lea.vmem [#allocation4], %s297
        %p299 = scmp.lt.s32.totalorder %s22, 1
        %s300 = scalar_select %p299, %s22, 1
        %s301 = smul.addr %s300, 2
        %s302 = smul.addr %s301, 8
        %s303 = scalar_lea.vmem %s0, %s302
        %v304 = vld [vmem:[%s303] sm:$0xff]
        %v305 = vld [vmem:[%s303 + $0x8] sm:$0xff]
        %v306 = vld [vmem:[%s2] sm:$0xff]
        %308 = vset.pattern.permute.xlu0 0
        %309 = vperm.xlu0 %308, %v306
        %v310 = vpop.permute.xlu0 %309
        %v312 = vmul.f32 %v304, %v310
        %v313 = vmul.f32 %v305, %v310
        %v314 = vld [vmem:[%s3] sm:$0xff]
        %316 = vset.pattern.permute.xlu0 0
        %317 = vperm.xlu0 %316, %v314
        %v318 = vpop.permute.xlu0 %317
        %v320 = vadd.f32 %v312, %v318
        %v321 = vadd.f32 %v313, %v318
        %v322 = vmax.f32 %v320, 0.0
        %v323 = vmax.f32 %v321, 0.0
        %324 = vst [vmem:[#allocation2] sm:$0xff] %v322
        %325 = vst [vmem:[#allocation2 + $0x8] sm:$0xff] %v323
        %v326 = vld [vmem:[#allocation2] sm:$0xff]
        %v327 = vld [vmem:[#allocation2 + $0x8] sm:$0xff]
        %328 = vrot.lane.b32.xlu0 %v326, 17
        %v329 = vpop.permute.xlu0 %328
        %330 = vrot.lane.b32.xlu0 %v327, 17
        %v331 = vpop.permute.xlu0 %330
        %v332 = vlaneseq
        %v333 = vand.u32 %v332, 127
        %vm334 = vcmp.lt.s32.totalorder %v333, 17
        %v335 = vsel %vm334, %v329, %v331
        %v336 = vsel %vm334, %v331, %v329
        %v337 = vld [vmem:[%s1] ss:$8 sm:$0x3]
        %v339 = vperm.slane %v337, 0
        %v340 = vperm.slane %v337, 1
        %v343 = vmul.f32 %v336, %v339
        %v344 = vmul.f32 %v335, %v340
        %v345 = vld [vmem:[%s4] sm:$0xff]
        %346 = vrot.lane.b32.xlu0 %v326, 16
        %v347 = vpop.permute.xlu0 %346
        %348 = vrot.lane.b32.xlu0 %v327, 16
        %v349 = vpop.permute.xlu0 %348
        %vm350 = vcmp.lt.s32.totalorder %v333, 16
        %v351 = vsel %vm350, %v347, %v349
        %v352 = vsel %vm350, %v349, %v347
        %s353 = scalar_lea.vmem %s1, 1
        %v354 = vld [vmem:[%s353] ss:$8 sm:$0x3]
        %v356 = vperm.slane %v354, 0
        %v357 = vperm.slane %v354, 1
        %v360 = vmul.f32 %v352, %v356
        %v361 = vmul.f32 %v351, %v357
        %s362 = scalar_lea.vmem %s4, 8
        %v363 = vld [vmem:[%s362] sm:$0xff]
        %vm364 = vcmask 64512
        %v366 = vsel %vm364, %v363, 0
        %368 = vmatpush.msra.mxu0 0.0
        %369 = vmatpush.msra.mxu0 0.0
        %370 = vmatpush.msra.mxu0 0.0
        %371 = vmatpush.msra.mxu0 0.0
        %372 = vmatpush.msra.mxu0 0.0
        %373 = vmatpush.msra.mxu0 0.0
        %374 = vmatpush.msra.mxu0 0.0
        %375 = vmatpush.msra.mxu0 0.0
        %376 = vmatpush.msra.mxu0 0.0
        %377 = vmatpush.msra.mxu0 0.0
        %378 = vmatpush.msra.mxu0 0.0
        %379 = vmatpush.msra.mxu0 0.0
        %380 = vmatpush.msra.mxu0 0.0
        %381 = vmatpush.msra.mxu0 0.0
        %382 = vmatpush.msra.mxu0 0.0
        %383 = vmatpush.msra.mxu0 %v360
        %384 = vmatmul.f32.gmra.mxu0 %v366
        %v385 = vpop.f32.mrf.mxu0
        %v386 = vadd.f32 0.0, %v385
        %387 = vdwg.mxu0
        %388 = vmatpush.msra.mxu0 0.0
        %389 = vmatpush.msra.mxu0 0.0
        %390 = vmatpush.msra.mxu0 0.0
        %391 = vmatpush.msra.mxu0 0.0
        %392 = vmatpush.msra.mxu0 0.0
        %393 = vmatpush.msra.mxu0 0.0
        %394 = vmatpush.msra.mxu0 0.0
        %395 = vmatpush.msra.mxu0 0.0
        %396 = vmatpush.msra.mxu0 0.0
        %397 = vmatpush.msra.mxu0 0.0
        %398 = vmatpush.msra.mxu0 0.0
        %399 = vmatpush.msra.mxu0 0.0
        %400 = vmatpush.msra.mxu0 0.0
        %401 = vmatpush.msra.mxu0 0.0
        %402 = vmatpush.msra.mxu0 0.0
        %403 = vmatpush.msra.mxu0 %v361
        %404 = vmatmul.f32.gmra.mxu0 %v366
        %v405 = vpop.f32.mrf.mxu0
        %v406 = vadd.f32 0.0, %v405
        %407 = vdwg.mxu0
        %v409 = vsel %vm364, %v345, 0
        %411 = vmatpush.msra.mxu0 0.0
        %412 = vmatpush.msra.mxu0 0.0
        %413 = vmatpush.msra.mxu0 0.0
        %414 = vmatpush.msra.mxu0 0.0
        %415 = vmatpush.msra.mxu0 0.0
        %416 = vmatpush.msra.mxu0 0.0
        %417 = vmatpush.msra.mxu0 0.0
        %418 = vmatpush.msra.mxu0 0.0
        %419 = vmatpush.msra.mxu0 0.0
        %420 = vmatpush.msra.mxu0 0.0
        %421 = vmatpush.msra.mxu0 0.0
        %422 = vmatpush.msra.mxu0 0.0
        %423 = vmatpush.msra.mxu0 0.0
        %424 = vmatpush.msra.mxu0 0.0
        %425 = vmatpush.msra.mxu0 0.0
        %426 = vmatpush.msra.mxu0 %v343
        %427 = vmatmul.f32.gmra.mxu0 %v409
        %v428 = vpop.f32.mrf.mxu0
        %v429 = vadd.f32 %v386, %v428
        %430 = vdwg.mxu0
        %431 = vmatpush.msra.mxu0 0.0
        %432 = vmatpush.msra.mxu0 0.0
        %433 = vmatpush.msra.mxu0 0.0
        %434 = vmatpush.msra.mxu0 0.0
        %435 = vmatpush.msra.mxu0 0.0
        %436 = vmatpush.msra.mxu0 0.0
        %437 = vmatpush.msra.mxu0 0.0
        %438 = vmatpush.msra.mxu0 0.0
        %439 = vmatpush.msra.mxu0 0.0
        %440 = vmatpush.msra.mxu0 0.0
        %441 = vmatpush.msra.mxu0 0.0
        %442 = vmatpush.msra.mxu0 0.0
        %443 = vmatpush.msra.mxu0 0.0
        %444 = vmatpush.msra.mxu0 0.0
        %445 = vmatpush.msra.mxu0 0.0
        %446 = vmatpush.msra.mxu0 %v344
        %447 = vmatmul.f32.gmra.mxu0 %v409
        %v448 = vpop.f32.mrf.mxu0
        %v449 = vadd.f32 %v406, %v448
        %450 = vdwg.mxu0
        %451 = vrot.lane.b32.xlu0 %v326, 15
        %v452 = vpop.permute.xlu0 %451
        %453 = vrot.lane.b32.xlu0 %v327, 15
        %v454 = vpop.permute.xlu0 %453
        %vm455 = vcmp.lt.s32.totalorder %v333, 15
        %v456 = vsel %vm455, %v452, %v454
        %v457 = vsel %vm455, %v454, %v452
        %s458 = scalar_lea.vmem %s1, 2
        %v459 = vld [vmem:[%s458] ss:$8 sm:$0x3]
        %v461 = vperm.slane %v459, 0
        %v462 = vperm.slane %v459, 1
        %v465 = vmul.f32 %v457, %v461
        %v466 = vmul.f32 %v456, %v462
        %s467 = scalar_lea.vmem %s4, 16
        %v468 = vld [vmem:[%s467] sm:$0xff]
        %v470 = vsel %vm364, %v468, 0
        %472 = vmatpush.msra.mxu0 0.0
        %473 = vmatpush.msra.mxu0 0.0
        %474 = vmatpush.msra.mxu0 0.0
        %475 = vmatpush.msra.mxu0 0.0
        %476 = vmatpush.msra.mxu0 0.0
        %477 = vmatpush.msra.mxu0 0.0
        %478 = vmatpush.msra.mxu0 0.0
        %479 = vmatpush.msra.mxu0 0.0
        %480 = vmatpush.msra.mxu0 0.0
        %481 = vmatpush.msra.mxu0 0.0
        %482 = vmatpush.msra.mxu0 0.0
        %483 = vmatpush.msra.mxu0 0.0
        %484 = vmatpush.msra.mxu0 0.0
        %485 = vmatpush.msra.mxu0 0.0
        %486 = vmatpush.msra.mxu0 0.0
        %487 = vmatpush.msra.mxu0 %v465
        %488 = vmatmul.f32.gmra.mxu0 %v470
        %v489 = vpop.f32.mrf.mxu0
        %v490 = vadd.f32 0.0, %v489
        %491 = vdwg.mxu0
        %492 = vmatpush.msra.mxu0 0.0
        %493 = vmatpush.msra.mxu0 0.0
        %494 = vmatpush.msra.mxu0 0.0
        %495 = vmatpush.msra.mxu0 0.0
        %496 = vmatpush.msra.mxu0 0.0
        %497 = vmatpush.msra.mxu0 0.0
        %498 = vmatpush.msra.mxu0 0.0
        %499 = vmatpush.msra.mxu0 0.0
        %500 = vmatpush.msra.mxu0 0.0
        %501 = vmatpush.msra.mxu0 0.0
        %502 = vmatpush.msra.mxu0 0.0
        %503 = vmatpush.msra.mxu0 0.0
        %504 = vmatpush.msra.mxu0 0.0
        %505 = vmatpush.msra.mxu0 0.0
        %506 = vmatpush.msra.mxu0 0.0
        %507 = vmatpush.msra.mxu0 %v466
        %508 = vmatmul.f32.gmra.mxu0 %v470
        %v509 = vpop.f32.mrf.mxu0
        %v510 = vadd.f32 0.0, %v509
        %511 = vdwg.mxu0
        %v512 = vadd.f32 %v429, %v490
        %v513 = vadd.f32 %v449, %v510
        %514 = vrot.lane.b32.xlu0 %v326, 1
        %v515 = vpop.permute.xlu0 %514
        %516 = vrot.lane.b32.xlu0 %v327, 1
        %v517 = vpop.permute.xlu0 %516
        %vm518 = vcmp.lt.s32.totalorder %v333, 1
        %v519 = vsel %vm518, %v515, %v517
        %v520 = vsel %vm518, %v517, %v515
        %s521 = scalar_lea.vmem %s1, 3
        %v522 = vld [vmem:[%s521] ss:$8 sm:$0x3]
        %v524 = vperm.slane %v522, 0
        %v525 = vperm.slane %v522, 1
        %v528 = vmul.f32 %v520, %v524
        %v529 = vmul.f32 %v519, %v525
        %s530 = scalar_lea.vmem %s4, 24
        %v531 = vld [vmem:[%s530] sm:$0xff]
        %v533 = vsel %vm364, %v531, 0
        %535 = vmatpush.msra.mxu0 0.0
        %536 = vmatpush.msra.mxu0 0.0
        %537 = vmatpush.msra.mxu0 0.0
        %538 = vmatpush.msra.mxu0 0.0
        %539 = vmatpush.msra.mxu0 0.0
        %540 = vmatpush.msra.mxu0 0.0
        %541 = vmatpush.msra.mxu0 0.0
        %542 = vmatpush.msra.mxu0 0.0
        %543 = vmatpush.msra.mxu0 0.0
        %544 = vmatpush.msra.mxu0 0.0
        %545 = vmatpush.msra.mxu0 0.0
        %546 = vmatpush.msra.mxu0 0.0
        %547 = vmatpush.msra.mxu0 0.0
        %548 = vmatpush.msra.mxu0 0.0
        %549 = vmatpush.msra.mxu0 0.0
        %550 = vmatpush.msra.mxu0 %v528
        %551 = vmatmul.f32.gmra.mxu0 %v533
        %v552 = vpop.f32.mrf.mxu0
        %v553 = vadd.f32 0.0, %v552
        %554 = vdwg.mxu0
        %555 = vmatpush.msra.mxu0 0.0
        %556 = vmatpush.msra.mxu0 0.0
        %557 = vmatpush.msra.mxu0 0.0
        %558 = vmatpush.msra.mxu0 0.0
        %559 = vmatpush.msra.mxu0 0.0
        %560 = vmatpush.msra.mxu0 0.0
        %561 = vmatpush.msra.mxu0 0.0
        %562 = vmatpush.msra.mxu0 0.0
        %563 = vmatpush.msra.mxu0 0.0
        %564 = vmatpush.msra.mxu0 0.0
        %565 = vmatpush.msra.mxu0 0.0
        %566 = vmatpush.msra.mxu0 0.0
        %567 = vmatpush.msra.mxu0 0.0
        %568 = vmatpush.msra.mxu0 0.0
        %569 = vmatpush.msra.mxu0 0.0
        %570 = vmatpush.msra.mxu0 %v529
        %571 = vmatmul.f32.gmra.mxu0 %v533
        %v572 = vpop.f32.mrf.mxu0
        %v573 = vadd.f32 0.0, %v572
        %574 = vdwg.mxu0
        %v575 = vadd.f32 %v512, %v553
        %v576 = vadd.f32 %v513, %v573
        %s577 = scalar_lea.vmem %s4, 32
        %v578 = vld [vmem:[%s577] sm:$0xff]
        %v580 = vsel %vm364, %v578, 0
        %582 = vmatpush.msra.mxu0 0.0
        %583 = vmatpush.msra.mxu0 0.0
        %584 = vmatpush.msra.mxu0 0.0
        %585 = vmatpush.msra.mxu0 0.0
        %586 = vmatpush.msra.mxu0 0.0
        %587 = vmatpush.msra.mxu0 0.0
        %588 = vmatpush.msra.mxu0 0.0
        %589 = vmatpush.msra.mxu0 0.0
        %590 = vmatpush.msra.mxu0 0.0
        %591 = vmatpush.msra.mxu0 0.0
        %592 = vmatpush.msra.mxu0 0.0
        %593 = vmatpush.msra.mxu0 0.0
        %594 = vmatpush.msra.mxu0 0.0
        %595 = vmatpush.msra.mxu0 0.0
        %596 = vmatpush.msra.mxu0 0.0
        %597 = vmatpush.msra.mxu0 %v326
        %598 = vmatmul.f32.gmra.mxu0 %v580
        %v599 = vpop.f32.mrf.mxu0
        %v600 = vadd.f32 0.0, %v599
        %601 = vdwg.mxu0
        %602 = vmatpush.msra.mxu0 0.0
        %603 = vmatpush.msra.mxu0 0.0
        %604 = vmatpush.msra.mxu0 0.0
        %605 = vmatpush.msra.mxu0 0.0
        %606 = vmatpush.msra.mxu0 0.0
        %607 = vmatpush.msra.mxu0 0.0
        %608 = vmatpush.msra.mxu0 0.0
        %609 = vmatpush.msra.mxu0 0.0
        %610 = vmatpush.msra.mxu0 0.0
        %611 = vmatpush.msra.mxu0 0.0
        %612 = vmatpush.msra.mxu0 0.0
        %613 = vmatpush.msra.mxu0 0.0
        %614 = vmatpush.msra.mxu0 0.0
        %615 = vmatpush.msra.mxu0 0.0
        %616 = vmatpush.msra.mxu0 0.0
        %617 = vmatpush.msra.mxu0 %v327
        %618 = vmatmul.f32.gmra.mxu0 %v580
        %v619 = vpop.f32.mrf.mxu0
        %v620 = vadd.f32 0.0, %v619
        %621 = vdwg.mxu0
        %v622 = vadd.f32 %v575, %v600
        %v623 = vadd.f32 %v576, %v620
        %624 = vrot.lane.b32.xlu0 %v326, 127
        %v625 = vpop.permute.xlu0 %624
        %626 = vrot.lane.b32.xlu0 %v327, 127
        %v627 = vpop.permute.xlu0 %626
        %vm628 = vcmp.lt.s32.totalorder %v333, 127
        %v629 = vsel %vm628, %v625, %v627
        %v630 = vsel %vm628, %v627, %v625
        %s631 = scalar_lea.vmem %s1, 5
        %v632 = vld [vmem:[%s631] ss:$8 sm:$0x3]
        %v634 = vperm.slane %v632, 0
        %v635 = vperm.slane %v632, 1
        %v638 = vmul.f32 %v629, %v634
        %v639 = vmul.f32 %v630, %v635
        %s640 = scalar_lea.vmem %s4, 40
        %v641 = vld [vmem:[%s640] sm:$0xff]
        %v643 = vsel %vm364, %v641, 0
        %645 = vmatpush.msra.mxu0 0.0
        %646 = vmatpush.msra.mxu0 0.0
        %647 = vmatpush.msra.mxu0 0.0
        %648 = vmatpush.msra.mxu0 0.0
        %649 = vmatpush.msra.mxu0 0.0
        %650 = vmatpush.msra.mxu0 0.0
        %651 = vmatpush.msra.mxu0 0.0
        %652 = vmatpush.msra.mxu0 0.0
        %653 = vmatpush.msra.mxu0 0.0
        %654 = vmatpush.msra.mxu0 0.0
        %655 = vmatpush.msra.mxu0 0.0
        %656 = vmatpush.msra.mxu0 0.0
        %657 = vmatpush.msra.mxu0 0.0
        %658 = vmatpush.msra.mxu0 0.0
        %659 = vmatpush.msra.mxu0 0.0
        %660 = vmatpush.msra.mxu0 %v638
        %661 = vmatmul.f32.gmra.mxu0 %v643
        %v662 = vpop.f32.mrf.mxu0
        %v663 = vadd.f32 0.0, %v662
        %664 = vdwg.mxu0
        %665 = vmatpush.msra.mxu0 0.0
        %666 = vmatpush.msra.mxu0 0.0
        %667 = vmatpush.msra.mxu0 0.0
        %668 = vmatpush.msra.mxu0 0.0
        %669 = vmatpush.msra.mxu0 0.0
        %670 = vmatpush.msra.mxu0 0.0
        %671 = vmatpush.msra.mxu0 0.0
        %672 = vmatpush.msra.mxu0 0.0
        %673 = vmatpush.msra.mxu0 0.0
        %674 = vmatpush.msra.mxu0 0.0
        %675 = vmatpush.msra.mxu0 0.0
        %676 = vmatpush.msra.mxu0 0.0
        %677 = vmatpush.msra.mxu0 0.0
        %678 = vmatpush.msra.mxu0 0.0
        %679 = vmatpush.msra.mxu0 0.0
        %680 = vmatpush.msra.mxu0 %v639
        %681 = vmatmul.f32.gmra.mxu0 %v643
        %v682 = vpop.f32.mrf.mxu0
        %v683 = vadd.f32 0.0, %v682
        %684 = vdwg.mxu0
        %v685 = vadd.f32 %v622, %v663
        %v686 = vadd.f32 %v623, %v683
        %687 = vrot.lane.b32.xlu0 %v326, 113
        %v688 = vpop.permute.xlu0 %687
        %689 = vrot.lane.b32.xlu0 %v327, 113
        %v690 = vpop.permute.xlu0 %689
        %vm691 = vcmp.lt.s32.totalorder %v333, 113
        %v692 = vsel %vm691, %v688, %v690
        %v693 = vsel %vm691, %v690, %v688
        %s694 = scalar_lea.vmem %s1, 6
        %v695 = vld [vmem:[%s694] ss:$8 sm:$0x3]
        %v697 = vperm.slane %v695, 0
        %v698 = vperm.slane %v695, 1
        %v701 = vmul.f32 %v692, %v697
        %v702 = vmul.f32 %v693, %v698
        %s703 = scalar_lea.vmem %s4, 48
        %v704 = vld [vmem:[%s703] sm:$0xff]
        %v706 = vsel %vm364, %v704, 0
        %708 = vmatpush.msra.mxu0 0.0
        %709 = vmatpush.msra.mxu0 0.0
        %710 = vmatpush.msra.mxu0 0.0
        %711 = vmatpush.msra.mxu0 0.0
        %712 = vmatpush.msra.mxu0 0.0
        %713 = vmatpush.msra.mxu0 0.0
        %714 = vmatpush.msra.mxu0 0.0
        %715 = vmatpush.msra.mxu0 0.0
        %716 = vmatpush.msra.mxu0 0.0
        %717 = vmatpush.msra.mxu0 0.0
        %718 = vmatpush.msra.mxu0 0.0
        %719 = vmatpush.msra.mxu0 0.0
        %720 = vmatpush.msra.mxu0 0.0
        %721 = vmatpush.msra.mxu0 0.0
        %722 = vmatpush.msra.mxu0 0.0
        %723 = vmatpush.msra.mxu0 %v701
        %724 = vmatmul.f32.gmra.mxu0 %v706
        %v725 = vpop.f32.mrf.mxu0
        %v726 = vadd.f32 0.0, %v725
        %727 = vdwg.mxu0
        %728 = vmatpush.msra.mxu0 0.0
        %729 = vmatpush.msra.mxu0 0.0
        %730 = vmatpush.msra.mxu0 0.0
        %731 = vmatpush.msra.mxu0 0.0
        %732 = vmatpush.msra.mxu0 0.0
        %733 = vmatpush.msra.mxu0 0.0
        %734 = vmatpush.msra.mxu0 0.0
        %735 = vmatpush.msra.mxu0 0.0
        %736 = vmatpush.msra.mxu0 0.0
        %737 = vmatpush.msra.mxu0 0.0
        %738 = vmatpush.msra.mxu0 0.0
        %739 = vmatpush.msra.mxu0 0.0
        %740 = vmatpush.msra.mxu0 0.0
        %741 = vmatpush.msra.mxu0 0.0
        %742 = vmatpush.msra.mxu0 0.0
        %743 = vmatpush.msra.mxu0 %v702
        %744 = vmatmul.f32.gmra.mxu0 %v706
        %v745 = vpop.f32.mrf.mxu0
        %v746 = vadd.f32 0.0, %v745
        %747 = vdwg.mxu0
        %v748 = vadd.f32 %v685, %v726
        %v749 = vadd.f32 %v686, %v746
        %750 = vrot.lane.b32.xlu0 %v326, 112
        %v751 = vpop.permute.xlu0 %750
        %752 = vrot.lane.b32.xlu0 %v327, 112
        %v753 = vpop.permute.xlu0 %752
        %vm754 = vcmp.lt.s32.totalorder %v333, 112
        %v755 = vsel %vm754, %v751, %v753
        %v756 = vsel %vm754, %v753, %v751
        %s757 = scalar_lea.vmem %s1, 7
        %v758 = vld [vmem:[%s757] ss:$8 sm:$0x3]
        %v760 = vperm.slane %v758, 0
        %v761 = vperm.slane %v758, 1
        %v764 = vmul.f32 %v755, %v760
        %v765 = vmul.f32 %v756, %v761
        %s766 = scalar_lea.vmem %s4, 56
        %v767 = vld [vmem:[%s766] sm:$0xff]
        %v769 = vsel %vm364, %v767, 0
        %771 = vmatpush.msra.mxu0 0.0
        %772 = vmatpush.msra.mxu0 0.0
        %773 = vmatpush.msra.mxu0 0.0
        %774 = vmatpush.msra.mxu0 0.0
        %775 = vmatpush.msra.mxu0 0.0
        %776 = vmatpush.msra.mxu0 0.0
        %777 = vmatpush.msra.mxu0 0.0
        %778 = vmatpush.msra.mxu0 0.0
        %779 = vmatpush.msra.mxu0 0.0
        %780 = vmatpush.msra.mxu0 0.0
        %781 = vmatpush.msra.mxu0 0.0
        %782 = vmatpush.msra.mxu0 0.0
        %783 = vmatpush.msra.mxu0 0.0
        %784 = vmatpush.msra.mxu0 0.0
        %785 = vmatpush.msra.mxu0 0.0
        %786 = vmatpush.msra.mxu0 %v764
        %787 = vmatmul.f32.gmra.mxu0 %v769
        %v788 = vpop.f32.mrf.mxu0
        %v789 = vadd.f32 0.0, %v788
        %790 = vdwg.mxu0
        %791 = vmatpush.msra.mxu0 0.0
        %792 = vmatpush.msra.mxu0 0.0
        %793 = vmatpush.msra.mxu0 0.0
        %794 = vmatpush.msra.mxu0 0.0
        %795 = vmatpush.msra.mxu0 0.0
        %796 = vmatpush.msra.mxu0 0.0
        %797 = vmatpush.msra.mxu0 0.0
        %798 = vmatpush.msra.mxu0 0.0
        %799 = vmatpush.msra.mxu0 0.0
        %800 = vmatpush.msra.mxu0 0.0
        %801 = vmatpush.msra.mxu0 0.0
        %802 = vmatpush.msra.mxu0 0.0
        %803 = vmatpush.msra.mxu0 0.0
        %804 = vmatpush.msra.mxu0 0.0
        %805 = vmatpush.msra.mxu0 0.0
        %806 = vmatpush.msra.mxu0 %v765
        %807 = vmatmul.f32.gmra.mxu0 %v769
        %v808 = vpop.f32.mrf.mxu0
        %v809 = vadd.f32 0.0, %v808
        %810 = vdwg.mxu0
        %v811 = vadd.f32 %v748, %v789
        %v812 = vadd.f32 %v749, %v809
        %813 = vrot.lane.b32.xlu0 %v326, 111
        %v814 = vpop.permute.xlu0 %813
        %815 = vrot.lane.b32.xlu0 %v327, 111
        %v816 = vpop.permute.xlu0 %815
        %vm817 = vcmp.lt.s32.totalorder %v333, 111
        %v818 = vsel %vm817, %v814, %v816
        %v819 = vsel %vm817, %v816, %v814
        %s820 = scalar_lea.vmem %s1, 16
        %v821 = vld [vmem:[%s820] ss:$8 sm:$0x3]
        %v823 = vperm.slane %v821, 0
        %v824 = vperm.slane %v821, 1
        %v827 = vmul.f32 %v818, %v823
        %v828 = vmul.f32 %v819, %v824
        %s829 = scalar_lea.vmem %s4, 64
        %v830 = vld [vmem:[%s829] sm:$0xff]
        %v832 = vsel %vm364, %v830, 0
        %834 = vmatpush.msra.mxu0 0.0
        %835 = vmatpush.msra.mxu0 0.0
        %836 = vmatpush.msra.mxu0 0.0
        %837 = vmatpush.msra.mxu0 0.0
        %838 = vmatpush.msra.mxu0 0.0
        %839 = vmatpush.msra.mxu0 0.0
        %840 = vmatpush.msra.mxu0 0.0
        %841 = vmatpush.msra.mxu0 0.0
        %842 = vmatpush.msra.mxu0 0.0
        %843 = vmatpush.msra.mxu0 0.0
        %844 = vmatpush.msra.mxu0 0.0
        %845 = vmatpush.msra.mxu0 0.0
        %846 = vmatpush.msra.mxu0 0.0
        %847 = vmatpush.msra.mxu0 0.0
        %848 = vmatpush.msra.mxu0 0.0
        %849 = vmatpush.msra.mxu0 %v827
        %850 = vmatmul.f32.gmra.mxu0 %v832
        %v851 = vpop.f32.mrf.mxu0
        %v852 = vadd.f32 0.0, %v851
        %853 = vdwg.mxu0
        %854 = vmatpush.msra.mxu0 0.0
        %855 = vmatpush.msra.mxu0 0.0
        %856 = vmatpush.msra.mxu0 0.0
        %857 = vmatpush.msra.mxu0 0.0
        %858 = vmatpush.msra.mxu0 0.0
        %859 = vmatpush.msra.mxu0 0.0
        %860 = vmatpush.msra.mxu0 0.0
        %861 = vmatpush.msra.mxu0 0.0
        %862 = vmatpush.msra.mxu0 0.0
        %863 = vmatpush.msra.mxu0 0.0
        %864 = vmatpush.msra.mxu0 0.0
        %865 = vmatpush.msra.mxu0 0.0
        %866 = vmatpush.msra.mxu0 0.0
        %867 = vmatpush.msra.mxu0 0.0
        %868 = vmatpush.msra.mxu0 0.0
        %869 = vmatpush.msra.mxu0 %v828
        %870 = vmatmul.f32.gmra.mxu0 %v832
        %v871 = vpop.f32.mrf.mxu0
        %v872 = vadd.f32 0.0, %v871
        %873 = vdwg.mxu0
        %v874 = vadd.f32 %v811, %v852
        %v875 = vadd.f32 %v812, %v872
        %v876 = vld [vmem:[%s5] sm:$0xff]
        %878 = vset.pattern.permute.xlu0 0
        %879 = vperm.xlu0 %878, %v876
        %v880 = vpop.permute.xlu0 %879
        %v882 = vadd.f32 %v874, %v880
        %v883 = vadd.f32 %v875, %v880
        %v884 = vmax.f32 %v882, 0.0
        %v885 = vmax.f32 %v883, 0.0
        %886 = vst [vmem:[#allocation3] sm:$0xff] %v884
        %887 = vst [vmem:[#allocation3 + $0x8] sm:$0xff] %v885
        %v888 = vld [vmem:[#allocation3] sm:$0xff]
        %v889 = vld [vmem:[#allocation3 + $0x8] sm:$0xff]
        %v890 = vld [vmem:[%s7] sm:$0xff]
        %v891 = vld [vmem:[#allocation2] sm:$0xff]
        %v892 = vld [vmem:[#allocation2 + $0x8] sm:$0xff]
        %893 = vrot.lane.b32.xlu0 %v888, 17
        %v894 = vpop.permute.xlu0 %893
        %895 = vrot.lane.b32.xlu0 %v889, 17
        %v896 = vpop.permute.xlu0 %895
        %v897 = vsel %vm334, %v894, %v896
        %v898 = vsel %vm334, %v896, %v894
        %v899 = vld [vmem:[%s1] ss:$8 sm:$0x3]
        %v901 = vperm.slane %v899, 0
        %v902 = vperm.slane %v899, 1
        %v905 = vmul.f32 %v898, %v901
        %v906 = vmul.f32 %v897, %v902
        %v907 = vld [vmem:[%s6] sm:$0xff]
        %v909 = vsel %vm364, %v907, 0
        %911 = vmatpush.msra.mxu0 0.0
        %912 = vmatpush.msra.mxu0 0.0
        %913 = vmatpush.msra.mxu0 0.0
        %914 = vmatpush.msra.mxu0 0.0
        %915 = vmatpush.msra.mxu0 0.0
        %916 = vmatpush.msra.mxu0 0.0
        %917 = vmatpush.msra.mxu0 0.0
        %918 = vmatpush.msra.mxu0 0.0
        %919 = vmatpush.msra.mxu0 0.0
        %920 = vmatpush.msra.mxu0 0.0
        %921 = vmatpush.msra.mxu0 0.0
        %922 = vmatpush.msra.mxu0 0.0
        %923 = vmatpush.msra.mxu0 0.0
        %924 = vmatpush.msra.mxu0 0.0
        %925 = vmatpush.msra.mxu0 0.0
        %926 = vmatpush.msra.mxu0 %v905
        %927 = vmatmul.f32.gmra.mxu0 %v909
        %v928 = vpop.f32.mrf.mxu0
        %v929 = vadd.f32 0.0, %v928
        %930 = vdwg.mxu0
        %931 = vmatpush.msra.mxu0 0.0
        %932 = vmatpush.msra.mxu0 0.0
        %933 = vmatpush.msra.mxu0 0.0
        %934 = vmatpush.msra.mxu0 0.0
        %935 = vmatpush.msra.mxu0 0.0
        %936 = vmatpush.msra.mxu0 0.0
        %937 = vmatpush.msra.mxu0 0.0
        %938 = vmatpush.msra.mxu0 0.0
        %939 = vmatpush.msra.mxu0 0.0
        %940 = vmatpush.msra.mxu0 0.0
        %941 = vmatpush.msra.mxu0 0.0
        %942 = vmatpush.msra.mxu0 0.0
        %943 = vmatpush.msra.mxu0 0.0
        %944 = vmatpush.msra.mxu0 0.0
        %945 = vmatpush.msra.mxu0 0.0
        %946 = vmatpush.msra.mxu0 %v906
        %947 = vmatmul.f32.gmra.mxu0 %v909
        %v948 = vpop.f32.mrf.mxu0
        %v949 = vadd.f32 0.0, %v948
        %950 = vdwg.mxu0
        %v952 = vsel %vm364, %v890, 0
        %954 = vmatpush.msra.mxu0 0.0
        %955 = vmatpush.msra.mxu0 0.0
        %956 = vmatpush.msra.mxu0 0.0
        %957 = vmatpush.msra.mxu0 0.0
        %958 = vmatpush.msra.mxu0 0.0
        %959 = vmatpush.msra.mxu0 0.0
        %960 = vmatpush.msra.mxu0 0.0
        %961 = vmatpush.msra.mxu0 0.0
        %962 = vmatpush.msra.mxu0 0.0
        %963 = vmatpush.msra.mxu0 0.0
        %964 = vmatpush.msra.mxu0 0.0
        %965 = vmatpush.msra.mxu0 0.0
        %966 = vmatpush.msra.mxu0 0.0
        %967 = vmatpush.msra.mxu0 0.0
        %968 = vmatpush.msra.mxu0 0.0
        %969 = vmatpush.msra.mxu0 %v891
        %970 = vmatmul.f32.gmra.mxu0 %v952
        %v971 = vpop.f32.mrf.mxu0
        %v972 = vadd.f32 %v929, %v971
        %973 = vdwg.mxu0
        %974 = vmatpush.msra.mxu0 0.0
        %975 = vmatpush.msra.mxu0 0.0
        %976 = vmatpush.msra.mxu0 0.0
        %977 = vmatpush.msra.mxu0 0.0
        %978 = vmatpush.msra.mxu0 0.0
        %979 = vmatpush.msra.mxu0 0.0
        %980 = vmatpush.msra.mxu0 0.0
        %981 = vmatpush.msra.mxu0 0.0
        %982 = vmatpush.msra.mxu0 0.0
        %983 = vmatpush.msra.mxu0 0.0
        %984 = vmatpush.msra.mxu0 0.0
        %985 = vmatpush.msra.mxu0 0.0
        %986 = vmatpush.msra.mxu0 0.0
        %987 = vmatpush.msra.mxu0 0.0
        %988 = vmatpush.msra.mxu0 0.0
        %989 = vmatpush.msra.mxu0 %v892
        %990 = vmatmul.f32.gmra.mxu0 %v952
        %v991 = vpop.f32.mrf.mxu0
        %v992 = vadd.f32 %v949, %v991
        %993 = vdwg.mxu0
        %994 = vrot.lane.b32.xlu0 %v888, 16
        %v995 = vpop.permute.xlu0 %994
        %996 = vrot.lane.b32.xlu0 %v889, 16
        %v997 = vpop.permute.xlu0 %996
        %v998 = vsel %vm350, %v995, %v997
        %v999 = vsel %vm350, %v997, %v995
        %v1000 = vld [vmem:[%s353] ss:$8 sm:$0x3]
        %v1002 = vperm.slane %v1000, 0
        %v1003 = vperm.slane %v1000, 1
        %v1006 = vmul.f32 %v999, %v1002
        %v1007 = vmul.f32 %v998, %v1003
        %s1008 = scalar_lea.vmem %s6, 8
        %v1009 = vld [vmem:[%s1008] sm:$0xff]
        %v1011 = vsel %vm364, %v1009, 0
        %1013 = vmatpush.msra.mxu0 0.0
        %1014 = vmatpush.msra.mxu0 0.0
        %1015 = vmatpush.msra.mxu0 0.0
        %1016 = vmatpush.msra.mxu0 0.0
        %1017 = vmatpush.msra.mxu0 0.0
        %1018 = vmatpush.msra.mxu0 0.0
        %1019 = vmatpush.msra.mxu0 0.0
        %1020 = vmatpush.msra.mxu0 0.0
        %1021 = vmatpush.msra.mxu0 0.0
        %1022 = vmatpush.msra.mxu0 0.0
        %1023 = vmatpush.msra.mxu0 0.0
        %1024 = vmatpush.msra.mxu0 0.0
        %1025 = vmatpush.msra.mxu0 0.0
        %1026 = vmatpush.msra.mxu0 0.0
        %1027 = vmatpush.msra.mxu0 0.0
        %1028 = vmatpush.msra.mxu0 %v1006
        %1029 = vmatmul.f32.gmra.mxu0 %v1011
        %v1030 = vpop.f32.mrf.mxu0
        %v1031 = vadd.f32 0.0, %v1030
        %1032 = vdwg.mxu0
        %1033 = vmatpush.msra.mxu0 0.0
        %1034 = vmatpush.msra.mxu0 0.0
        %1035 = vmatpush.msra.mxu0 0.0
        %1036 = vmatpush.msra.mxu0 0.0
        %1037 = vmatpush.msra.mxu0 0.0
        %1038 = vmatpush.msra.mxu0 0.0
        %1039 = vmatpush.msra.mxu0 0.0
        %1040 = vmatpush.msra.mxu0 0.0
        %1041 = vmatpush.msra.mxu0 0.0
        %1042 = vmatpush.msra.mxu0 0.0
        %1043 = vmatpush.msra.mxu0 0.0
        %1044 = vmatpush.msra.mxu0 0.0
        %1045 = vmatpush.msra.mxu0 0.0
        %1046 = vmatpush.msra.mxu0 0.0
        %1047 = vmatpush.msra.mxu0 0.0
        %1048 = vmatpush.msra.mxu0 %v1007
        %1049 = vmatmul.f32.gmra.mxu0 %v1011
        %v1050 = vpop.f32.mrf.mxu0
        %v1051 = vadd.f32 0.0, %v1050
        %1052 = vdwg.mxu0
        %v1053 = vadd.f32 %v972, %v1031
        %v1054 = vadd.f32 %v992, %v1051
        %1055 = vrot.lane.b32.xlu0 %v888, 15
        %v1056 = vpop.permute.xlu0 %1055
        %1057 = vrot.lane.b32.xlu0 %v889, 15
        %v1058 = vpop.permute.xlu0 %1057
        %v1059 = vsel %vm455, %v1056, %v1058
        %v1060 = vsel %vm455, %v1058, %v1056
        %v1061 = vld [vmem:[%s458] ss:$8 sm:$0x3]
        %v1063 = vperm.slane %v1061, 0
        %v1064 = vperm.slane %v1061, 1
        %v1067 = vmul.f32 %v1060, %v1063
        %v1068 = vmul.f32 %v1059, %v1064
        %s1069 = scalar_lea.vmem %s6, 16
        %v1070 = vld [vmem:[%s1069] sm:$0xff]
        %v1072 = vsel %vm364, %v1070, 0
        %1074 = vmatpush.msra.mxu0 0.0
        %1075 = vmatpush.msra.mxu0 0.0
        %1076 = vmatpush.msra.mxu0 0.0
        %1077 = vmatpush.msra.mxu0 0.0
        %1078 = vmatpush.msra.mxu0 0.0
        %1079 = vmatpush.msra.mxu0 0.0
        %1080 = vmatpush.msra.mxu0 0.0
        %1081 = vmatpush.msra.mxu0 0.0
        %1082 = vmatpush.msra.mxu0 0.0
        %1083 = vmatpush.msra.mxu0 0.0
        %1084 = vmatpush.msra.mxu0 0.0
        %1085 = vmatpush.msra.mxu0 0.0
        %1086 = vmatpush.msra.mxu0 0.0
        %1087 = vmatpush.msra.mxu0 0.0
        %1088 = vmatpush.msra.mxu0 0.0
        %1089 = vmatpush.msra.mxu0 %v1067
        %1090 = vmatmul.f32.gmra.mxu0 %v1072
        %v1091 = vpop.f32.mrf.mxu0
        %v1092 = vadd.f32 0.0, %v1091
        %1093 = vdwg.mxu0
        %1094 = vmatpush.msra.mxu0 0.0
        %1095 = vmatpush.msra.mxu0 0.0
        %1096 = vmatpush.msra.mxu0 0.0
        %1097 = vmatpush.msra.mxu0 0.0
        %1098 = vmatpush.msra.mxu0 0.0
        %1099 = vmatpush.msra.mxu0 0.0
        %1100 = vmatpush.msra.mxu0 0.0
        %1101 = vmatpush.msra.mxu0 0.0
        %1102 = vmatpush.msra.mxu0 0.0
        %1103 = vmatpush.msra.mxu0 0.0
        %1104 = vmatpush.msra.mxu0 0.0
        %1105 = vmatpush.msra.mxu0 0.0
        %1106 = vmatpush.msra.mxu0 0.0
        %1107 = vmatpush.msra.mxu0 0.0
        %1108 = vmatpush.msra.mxu0 0.0
        %1109 = vmatpush.msra.mxu0 %v1068
        %1110 = vmatmul.f32.gmra.mxu0 %v1072
        %v1111 = vpop.f32.mrf.mxu0
        %v1112 = vadd.f32 0.0, %v1111
        %1113 = vdwg.mxu0
        %v1114 = vadd.f32 %v1053, %v1092
        %v1115 = vadd.f32 %v1054, %v1112
        %1116 = vrot.lane.b32.xlu0 %v888, 1
        %v1117 = vpop.permute.xlu0 %1116
        %1118 = vrot.lane.b32.xlu0 %v889, 1
        %v1119 = vpop.permute.xlu0 %1118
        %v1120 = vsel %vm518, %v1117, %v1119
        %v1121 = vsel %vm518, %v1119, %v1117
        %v1122 = vld [vmem:[%s521] ss:$8 sm:$0x3]
        %v1124 = vperm.slane %v1122, 0
        %v1125 = vperm.slane %v1122, 1
        %v1128 = vmul.f32 %v1121, %v1124
        %v1129 = vmul.f32 %v1120, %v1125
        %s1130 = scalar_lea.vmem %s6, 24
        %v1131 = vld [vmem:[%s1130] sm:$0xff]
        %v1133 = vsel %vm364, %v1131, 0
        %1135 = vmatpush.msra.mxu0 0.0
        %1136 = vmatpush.msra.mxu0 0.0
        %1137 = vmatpush.msra.mxu0 0.0
        %1138 = vmatpush.msra.mxu0 0.0
        %1139 = vmatpush.msra.mxu0 0.0
        %1140 = vmatpush.msra.mxu0 0.0
        %1141 = vmatpush.msra.mxu0 0.0
        %1142 = vmatpush.msra.mxu0 0.0
        %1143 = vmatpush.msra.mxu0 0.0
        %1144 = vmatpush.msra.mxu0 0.0
        %1145 = vmatpush.msra.mxu0 0.0
        %1146 = vmatpush.msra.mxu0 0.0
        %1147 = vmatpush.msra.mxu0 0.0
        %1148 = vmatpush.msra.mxu0 0.0
        %1149 = vmatpush.msra.mxu0 0.0
        %1150 = vmatpush.msra.mxu0 %v1128
        %1151 = vmatmul.f32.gmra.mxu0 %v1133
        %v1152 = vpop.f32.mrf.mxu0
        %v1153 = vadd.f32 0.0, %v1152
        %1154 = vdwg.mxu0
        %1155 = vmatpush.msra.mxu0 0.0
        %1156 = vmatpush.msra.mxu0 0.0
        %1157 = vmatpush.msra.mxu0 0.0
        %1158 = vmatpush.msra.mxu0 0.0
        %1159 = vmatpush.msra.mxu0 0.0
        %1160 = vmatpush.msra.mxu0 0.0
        %1161 = vmatpush.msra.mxu0 0.0
        %1162 = vmatpush.msra.mxu0 0.0
        %1163 = vmatpush.msra.mxu0 0.0
        %1164 = vmatpush.msra.mxu0 0.0
        %1165 = vmatpush.msra.mxu0 0.0
        %1166 = vmatpush.msra.mxu0 0.0
        %1167 = vmatpush.msra.mxu0 0.0
        %1168 = vmatpush.msra.mxu0 0.0
        %1169 = vmatpush.msra.mxu0 0.0
        %1170 = vmatpush.msra.mxu0 %v1129
        %1171 = vmatmul.f32.gmra.mxu0 %v1133
        %v1172 = vpop.f32.mrf.mxu0
        %v1173 = vadd.f32 0.0, %v1172
        %1174 = vdwg.mxu0
        %v1175 = vadd.f32 %v1114, %v1153
        %v1176 = vadd.f32 %v1115, %v1173
        %s1177 = scalar_lea.vmem %s6, 32
        %v1178 = vld [vmem:[%s1177] sm:$0xff]
        %v1180 = vsel %vm364, %v1178, 0
        %1182 = vmatpush.msra.mxu0 0.0
        %1183 = vmatpush.msra.mxu0 0.0
        %1184 = vmatpush.msra.mxu0 0.0
        %1185 = vmatpush.msra.mxu0 0.0
        %1186 = vmatpush.msra.mxu0 0.0
        %1187 = vmatpush.msra.mxu0 0.0
        %1188 = vmatpush.msra.mxu0 0.0
        %1189 = vmatpush.msra.mxu0 0.0
        %1190 = vmatpush.msra.mxu0 0.0
        %1191 = vmatpush.msra.mxu0 0.0
        %1192 = vmatpush.msra.mxu0 0.0
        %1193 = vmatpush.msra.mxu0 0.0
        %1194 = vmatpush.msra.mxu0 0.0
        %1195 = vmatpush.msra.mxu0 0.0
        %1196 = vmatpush.msra.mxu0 0.0
        %1197 = vmatpush.msra.mxu0 %v888
        %1198 = vmatmul.f32.gmra.mxu0 %v1180
        %v1199 = vpop.f32.mrf.mxu0
        %v1200 = vadd.f32 0.0, %v1199
        %1201 = vdwg.mxu0
        %1202 = vmatpush.msra.mxu0 0.0
        %1203 = vmatpush.msra.mxu0 0.0
        %1204 = vmatpush.msra.mxu0 0.0
        %1205 = vmatpush.msra.mxu0 0.0
        %1206 = vmatpush.msra.mxu0 0.0
        %1207 = vmatpush.msra.mxu0 0.0
        %1208 = vmatpush.msra.mxu0 0.0
        %1209 = vmatpush.msra.mxu0 0.0
        %1210 = vmatpush.msra.mxu0 0.0
        %1211 = vmatpush.msra.mxu0 0.0
        %1212 = vmatpush.msra.mxu0 0.0
        %1213 = vmatpush.msra.mxu0 0.0
        %1214 = vmatpush.msra.mxu0 0.0
        %1215 = vmatpush.msra.mxu0 0.0
        %1216 = vmatpush.msra.mxu0 0.0
        %1217 = vmatpush.msra.mxu0 %v889
        %1218 = vmatmul.f32.gmra.mxu0 %v1180
        %v1219 = vpop.f32.mrf.mxu0
        %v1220 = vadd.f32 0.0, %v1219
        %1221 = vdwg.mxu0
        %v1222 = vadd.f32 %v1175, %v1200
        %v1223 = vadd.f32 %v1176, %v1220
        %1224 = vrot.lane.b32.xlu0 %v888, 127
        %v1225 = vpop.permute.xlu0 %1224
        %1226 = vrot.lane.b32.xlu0 %v889, 127
        %v1227 = vpop.permute.xlu0 %1226
        %v1228 = vsel %vm628, %v1225, %v1227
        %v1229 = vsel %vm628, %v1227, %v1225
        %v1230 = vld [vmem:[%s631] ss:$8 sm:$0x3]
        %v1232 = vperm.slane %v1230, 0
        %v1233 = vperm.slane %v1230, 1
        %v1236 = vmul.f32 %v1228, %v1232
        %v1237 = vmul.f32 %v1229, %v1233
        %s1238 = scalar_lea.vmem %s6, 40
        %v1239 = vld [vmem:[%s1238] sm:$0xff]
        %v1241 = vsel %vm364, %v1239, 0
        %1243 = vmatpush.msra.mxu0 0.0
        %1244 = vmatpush.msra.mxu0 0.0
        %1245 = vmatpush.msra.mxu0 0.0
        %1246 = vmatpush.msra.mxu0 0.0
        %1247 = vmatpush.msra.mxu0 0.0
        %1248 = vmatpush.msra.mxu0 0.0
        %1249 = vmatpush.msra.mxu0 0.0
        %1250 = vmatpush.msra.mxu0 0.0
        %1251 = vmatpush.msra.mxu0 0.0
        %1252 = vmatpush.msra.mxu0 0.0
        %1253 = vmatpush.msra.mxu0 0.0
        %1254 = vmatpush.msra.mxu0 0.0
        %1255 = vmatpush.msra.mxu0 0.0
        %1256 = vmatpush.msra.mxu0 0.0
        %1257 = vmatpush.msra.mxu0 0.0
        %1258 = vmatpush.msra.mxu0 %v1236
        %1259 = vmatmul.f32.gmra.mxu0 %v1241
        %v1260 = vpop.f32.mrf.mxu0
        %v1261 = vadd.f32 0.0, %v1260
        %1262 = vdwg.mxu0
        %1263 = vmatpush.msra.mxu0 0.0
        %1264 = vmatpush.msra.mxu0 0.0
        %1265 = vmatpush.msra.mxu0 0.0
        %1266 = vmatpush.msra.mxu0 0.0
        %1267 = vmatpush.msra.mxu0 0.0
        %1268 = vmatpush.msra.mxu0 0.0
        %1269 = vmatpush.msra.mxu0 0.0
        %1270 = vmatpush.msra.mxu0 0.0
        %1271 = vmatpush.msra.mxu0 0.0
        %1272 = vmatpush.msra.mxu0 0.0
        %1273 = vmatpush.msra.mxu0 0.0
        %1274 = vmatpush.msra.mxu0 0.0
        %1275 = vmatpush.msra.mxu0 0.0
        %1276 = vmatpush.msra.mxu0 0.0
        %1277 = vmatpush.msra.mxu0 0.0
        %1278 = vmatpush.msra.mxu0 %v1237
        %1279 = vmatmul.f32.gmra.mxu0 %v1241
        %v1280 = vpop.f32.mrf.mxu0
        %v1281 = vadd.f32 0.0, %v1280
        %1282 = vdwg.mxu0
        %v1283 = vadd.f32 %v1222, %v1261
        %v1284 = vadd.f32 %v1223, %v1281
        %1285 = vrot.lane.b32.xlu0 %v888, 113
        %v1286 = vpop.permute.xlu0 %1285
        %1287 = vrot.lane.b32.xlu0 %v889, 113
        %v1288 = vpop.permute.xlu0 %1287
        %v1289 = vsel %vm691, %v1286, %v1288
        %v1290 = vsel %vm691, %v1288, %v1286
        %v1291 = vld [vmem:[%s694] ss:$8 sm:$0x3]
        %v1293 = vperm.slane %v1291, 0
        %v1294 = vperm.slane %v1291, 1
        %v1297 = vmul.f32 %v1289, %v1293
        %v1298 = vmul.f32 %v1290, %v1294
        %s1299 = scalar_lea.vmem %s6, 48
        %v1300 = vld [vmem:[%s1299] sm:$0xff]
        %v1302 = vsel %vm364, %v1300, 0
        %1304 = vmatpush.msra.mxu0 0.0
        %1305 = vmatpush.msra.mxu0 0.0
        %1306 = vmatpush.msra.mxu0 0.0
        %1307 = vmatpush.msra.mxu0 0.0
        %1308 = vmatpush.msra.mxu0 0.0
        %1309 = vmatpush.msra.mxu0 0.0
        %1310 = vmatpush.msra.mxu0 0.0
        %1311 = vmatpush.msra.mxu0 0.0
        %1312 = vmatpush.msra.mxu0 0.0
        %1313 = vmatpush.msra.mxu0 0.0
        %1314 = vmatpush.msra.mxu0 0.0
        %1315 = vmatpush.msra.mxu0 0.0
        %1316 = vmatpush.msra.mxu0 0.0
        %1317 = vmatpush.msra.mxu0 0.0
        %1318 = vmatpush.msra.mxu0 0.0
        %1319 = vmatpush.msra.mxu0 %v1297
        %1320 = vmatmul.f32.gmra.mxu0 %v1302
        %v1321 = vpop.f32.mrf.mxu0
        %v1322 = vadd.f32 0.0, %v1321
        %1323 = vdwg.mxu0
        %1324 = vmatpush.msra.mxu0 0.0
        %1325 = vmatpush.msra.mxu0 0.0
        %1326 = vmatpush.msra.mxu0 0.0
        %1327 = vmatpush.msra.mxu0 0.0
        %1328 = vmatpush.msra.mxu0 0.0
        %1329 = vmatpush.msra.mxu0 0.0
        %1330 = vmatpush.msra.mxu0 0.0
        %1331 = vmatpush.msra.mxu0 0.0
        %1332 = vmatpush.msra.mxu0 0.0
        %1333 = vmatpush.msra.mxu0 0.0
        %1334 = vmatpush.msra.mxu0 0.0
        %1335 = vmatpush.msra.mxu0 0.0
        %1336 = vmatpush.msra.mxu0 0.0
        %1337 = vmatpush.msra.mxu0 0.0
        %1338 = vmatpush.msra.mxu0 0.0
        %1339 = vmatpush.msra.mxu0 %v1298
        %1340 = vmatmul.f32.gmra.mxu0 %v1302
        %v1341 = vpop.f32.mrf.mxu0
        %v1342 = vadd.f32 0.0, %v1341
        %1343 = vdwg.mxu0
        %v1344 = vadd.f32 %v1283, %v1322
        %v1345 = vadd.f32 %v1284, %v1342
        %1346 = vrot.lane.b32.xlu0 %v888, 112
        %v1347 = vpop.permute.xlu0 %1346
        %1348 = vrot.lane.b32.xlu0 %v889, 112
        %v1349 = vpop.permute.xlu0 %1348
        %v1350 = vsel %vm754, %v1347, %v1349
        %v1351 = vsel %vm754, %v1349, %v1347
        %v1352 = vld [vmem:[%s757] ss:$8 sm:$0x3]
        %v1354 = vperm.slane %v1352, 0
        %v1355 = vperm.slane %v1352, 1
        %v1358 = vmul.f32 %v1350, %v1354
        %v1359 = vmul.f32 %v1351, %v1355
        %s1360 = scalar_lea.vmem %s6, 56
        %v1361 = vld [vmem:[%s1360] sm:$0xff]
        %v1363 = vsel %vm364, %v1361, 0
        %1365 = vmatpush.msra.mxu0 0.0
        %1366 = vmatpush.msra.mxu0 0.0
        %1367 = vmatpush.msra.mxu0 0.0
        %1368 = vmatpush.msra.mxu0 0.0
        %1369 = vmatpush.msra.mxu0 0.0
        %1370 = vmatpush.msra.mxu0 0.0
        %1371 = vmatpush.msra.mxu0 0.0
        %1372 = vmatpush.msra.mxu0 0.0
        %1373 = vmatpush.msra.mxu0 0.0
        %1374 = vmatpush.msra.mxu0 0.0
        %1375 = vmatpush.msra.mxu0 0.0
        %1376 = vmatpush.msra.mxu0 0.0
        %1377 = vmatpush.msra.mxu0 0.0
        %1378 = vmatpush.msra.mxu0 0.0
        %1379 = vmatpush.msra.mxu0 0.0
        %1380 = vmatpush.msra.mxu0 %v1358
        %1381 = vmatmul.f32.gmra.mxu0 %v1363
        %v1382 = vpop.f32.mrf.mxu0
        %v1383 = vadd.f32 0.0, %v1382
        %1384 = vdwg.mxu0
        %1385 = vmatpush.msra.mxu0 0.0
        %1386 = vmatpush.msra.mxu0 0.0
        %1387 = vmatpush.msra.mxu0 0.0
        %1388 = vmatpush.msra.mxu0 0.0
        %1389 = vmatpush.msra.mxu0 0.0
        %1390 = vmatpush.msra.mxu0 0.0
        %1391 = vmatpush.msra.mxu0 0.0
        %1392 = vmatpush.msra.mxu0 0.0
        %1393 = vmatpush.msra.mxu0 0.0
        %1394 = vmatpush.msra.mxu0 0.0
        %1395 = vmatpush.msra.mxu0 0.0
        %1396 = vmatpush.msra.mxu0 0.0
        %1397 = vmatpush.msra.mxu0 0.0
        %1398 = vmatpush.msra.mxu0 0.0
        %1399 = vmatpush.msra.mxu0 0.0
        %1400 = vmatpush.msra.mxu0 %v1359
        %1401 = vmatmul.f32.gmra.mxu0 %v1363
        %v1402 = vpop.f32.mrf.mxu0
        %v1403 = vadd.f32 0.0, %v1402
        %1404 = vdwg.mxu0
        %v1405 = vadd.f32 %v1344, %v1383
        %v1406 = vadd.f32 %v1345, %v1403
        %1407 = vrot.lane.b32.xlu0 %v888, 111
        %v1408 = vpop.permute.xlu0 %1407
        %1409 = vrot.lane.b32.xlu0 %v889, 111
        %v1410 = vpop.permute.xlu0 %1409
        %v1411 = vsel %vm817, %v1408, %v1410
        %v1412 = vsel %vm817, %v1410, %v1408
        %v1413 = vld [vmem:[%s820] ss:$8 sm:$0x3]
        %v1415 = vperm.slane %v1413, 0
        %v1416 = vperm.slane %v1413, 1
        %v1419 = vmul.f32 %v1411, %v1415
        %v1420 = vmul.f32 %v1412, %v1416
        %s1421 = scalar_lea.vmem %s6, 64
        %v1422 = vld [vmem:[%s1421] sm:$0xff]
        %v1424 = vsel %vm364, %v1422, 0
        %1426 = vmatpush.msra.mxu0 0.0
        %1427 = vmatpush.msra.mxu0 0.0
        %1428 = vmatpush.msra.mxu0 0.0
        %1429 = vmatpush.msra.mxu0 0.0
        %1430 = vmatpush.msra.mxu0 0.0
        %1431 = vmatpush.msra.mxu0 0.0
        %1432 = vmatpush.msra.mxu0 0.0
        %1433 = vmatpush.msra.mxu0 0.0
        %1434 = vmatpush.msra.mxu0 0.0
        %1435 = vmatpush.msra.mxu0 0.0
        %1436 = vmatpush.msra.mxu0 0.0
        %1437 = vmatpush.msra.mxu0 0.0
        %1438 = vmatpush.msra.mxu0 0.0
        %1439 = vmatpush.msra.mxu0 0.0
        %1440 = vmatpush.msra.mxu0 0.0
        %1441 = vmatpush.msra.mxu0 %v1419
        %1442 = vmatmul.f32.gmra.mxu0 %v1424
        %v1443 = vpop.f32.mrf.mxu0
        %v1444 = vadd.f32 0.0, %v1443
        %1445 = vdwg.mxu0
        %1446 = vmatpush.msra.mxu0 0.0
        %1447 = vmatpush.msra.mxu0 0.0
        %1448 = vmatpush.msra.mxu0 0.0
        %1449 = vmatpush.msra.mxu0 0.0
        %1450 = vmatpush.msra.mxu0 0.0
        %1451 = vmatpush.msra.mxu0 0.0
        %1452 = vmatpush.msra.mxu0 0.0
        %1453 = vmatpush.msra.mxu0 0.0
        %1454 = vmatpush.msra.mxu0 0.0
        %1455 = vmatpush.msra.mxu0 0.0
        %1456 = vmatpush.msra.mxu0 0.0
        %1457 = vmatpush.msra.mxu0 0.0
        %1458 = vmatpush.msra.mxu0 0.0
        %1459 = vmatpush.msra.mxu0 0.0
        %1460 = vmatpush.msra.mxu0 0.0
        %1461 = vmatpush.msra.mxu0 %v1420
        %1462 = vmatmul.f32.gmra.mxu0 %v1424
        %v1463 = vpop.f32.mrf.mxu0
        %v1464 = vadd.f32 0.0, %v1463
        %1465 = vdwg.mxu0
        %v1466 = vadd.f32 %v1405, %v1444
        %v1467 = vadd.f32 %v1406, %v1464
        %1468 = vst [vmem:[%s298] sm:$0xff] %v1466
        %1469 = vst [vmem:[%s298 + $0x8] sm:$0xff] %v1467
        %s1470 = sand.u32 %s203, 1
        %s1471 = scalar_lea.sflag [#allocation5], %s1470
        %s1472 = sand.u32 %s203, 1
        %s1473 = smul.addr %s1472, 16
        %s1474 = scalar_lea.vmem [#allocation4], %s1473
        // Predicated region
        $region53: #{tpu_custom_call.1} parent=51 // pred_check
          %p1475 = pneg %p213
        $region54: #{tpu_custom_call.1} parent=51 // pred_check_branch
          %1477 = sbr.rel (%p1475) target = $region56
        $region55: #{tpu_custom_call.1} parent=51 // pred_region
          %1479 = vsyncadd %s1471, 0
          %s1480 = smul.addr %s22, 2
          %s1481 = smul.addr %s1480, 8
          %s1482 = scalar_lea.hbm %s8, %s1481
          %s1484 = sshll.u32 %s1474, 4
          %s1485 = int_to_ptr.vmem [resolvable:$true] %s1484
          %s1486 = sshll.u32 %s1482, 4
          %s1487 = int_to_ptr.hbm [resolvable:$true] %s1486
          %1489 = dma.vmem_to_hbm [thread:$0]  %s1485, 256, %s1487, %s1471
        $region56: #{tpu_custom_call.1} parent=51 // pred_fallthru
          _
      $region52: #{tpu_custom_call.1} parent=5 // pred_fallthru
        _
      %p1490 = scmp.le.s32.totalorder 2, %s17
      // Predicated region
      $region57: #{tpu_custom_call.1} parent=5 // pred_check
        %p1491 = pneg %p1490
      $region58: #{tpu_custom_call.1} parent=5 // pred_check_branch
        %1493 = sbr.rel (%p1491) target = $region60
      $region59: #{tpu_custom_call.1} parent=5 // pred_region
        %s1494 = ssub.s32 %s17, 2
        // Predicated region
        $region61: #{tpu_custom_call.1} parent=59 // pred_check
          %p1495 = pneg %p219
        $region62: #{tpu_custom_call.1} parent=59 // pred_check_branch
          %1497 = sbr.rel (%p1495) target = $region64
        $region63: #{tpu_custom_call.1} parent=59 // pred_region
          %s1498 = sand.u32 %s204, 1
          %s1499 = scalar_lea.sflag [#allocation5], %s1498
          %s1500 = sand.u32 %s204, 1
          %s1501 = smul.addr %s1500, 16
          %s1502 = scalar_lea.vmem [#allocation4], %s1501
          %1504 = dma.done %s1499, 256
        $region64: #{tpu_custom_call.1} parent=59 // pred_fallthru
          _
      $region60: #{tpu_custom_call.1} parent=5 // pred_fallthru
        _
    $region6: #{tpu_custom_call.1} parent=1 // loop_footer
      %s21 = sadd.s32 1, %s17
    $region7: #{tpu_custom_call.1} parent=1 // loop_footer_branch
      %16 = sbr.rel target = $region3
    $region8: #{tpu_custom_call.1} parent=1 // loop_exit
      _
    %1505 = vsyncpa [#allocation5], 1
    %s1506 = scalar_lea.sflag [#allocation5], 1
    %1507 = vsyncpa %s1506, 1

</llo_original>
